<compile_context>
chip_gen: v6e
topology: v6e:2x2x1
jax: 0.10.0
libtpu: 0.0.40
codegen_flags: <defaults>
</compile_context>

<pallas_src>
import functools

import jax
import jax.numpy as jnp
import numpy as np
from jax.experimental import pallas as pl
from jax.experimental.pallas import tpu as pltpu


def _split_f32(x):
    """Split an f32 array into bf16 (hi, lo) parts with x ~= hi + lo."""
    hi = x.astype(jnp.bfloat16)
    lo = (x - hi.astype(jnp.float32)).astype(jnp.bfloat16)
    return hi, lo


def _dot3(a_hi, a_lo, b_hi, b_lo):
    """~f32-accurate matmul as three single-pass bf16 MXU matmuls (bf16_3x).

    Mosaic only lowers Precision.DEFAULT / HIGHEST for f32 dots, so the
    3-pass scheme is spelled out explicitly; the dropped lo*lo term is
    O(2^-18) relative.
    """
    f32 = jnp.float32
    return (jnp.dot(a_hi, b_hi, preferred_element_type=f32)
            + jnp.dot(a_lo, b_hi, preferred_element_type=f32)
            + jnp.dot(a_hi, b_lo, preferred_element_type=f32))


def head_attention_kernel(xs_ref, rowe_ref,
                          wxh_ref, wxl_ref, bx_ref,
                          wreh_ref, wrel_ref, bre_ref,
                          sel_ref,
                          xout_ref, eout_ref,
                          *, B, N, d_head):
    f32 = jnp.float32
    dh = d_head
    ndh = N * dh
    BN = B * N

    # --- fused node projections: [Q_tiled | Ni_tiled | V zero-padded] -------
    xs_hi, xs_lo = _split_f32(xs_ref[...])                    # (B*N, d)
    px = _dot3(xs_hi, xs_lo, wxh_ref[...], wxl_ref[...]) + bx_ref[...]
    q_t  = px[:, :ndh]             # (B*N, ndh): Q[b,i,k]  at lane j*dh+k
    ni_d = px[:, ndh:2 * ndh]      # (B*N, ndh): Ni[b,i,k] at lane j*dh+k
    v_p  = px[:, 2 * ndh:]         # (B*N, ndh): V, zero-padded to full lanes

    # --- fused row + edge projections: [K_row | Nj_row | E], lane-dense -----
    # rowe rows [0, B*N)     : flattened e   -> only the E columns are read
    # rowe rows [B*N, 2*B*N) : replicated x  -> only the K/Nj columns are read
    re_hi, re_lo = _split_f32(rowe_ref[...])                  # (2*B*N, N*d)
    pre = _dot3(re_hi, re_lo, wreh_ref[...], wrel_ref[...]) + bre_ref[...]
    k_b  = pre[BN:, :ndh]          # (B*N, ndh): K[b,j,k]   at lane j*dh+k
    nj_b = pre[BN:, ndh:2 * ndh]   # (B*N, ndh): Nj[b,j,k]  at lane j*dh+k
    e_d  = pre[:BN, 2 * ndh:]      # (B*N, ndh): E[b,i,j,k] at lane j*dh+k

    # e_new[b,i, j*dh+k] = Ni[b,i,k] + Nj[b,j,k] + E[b,i,j,k]
    e_new = e_d + ni_d + nj_b
    eout_ref[...] = e_new          # full-tile, unmasked lane-dense store

    # Att[b,i,j] = (1/sqrt(dh)) * sum_k Q * e_new * K:
    # one lane-dense VPU product, then a dh-group lane segment-sum done as a
    # matmul against the pre-scaled 0/1 selection matrix (reduction on MXU,
    # never materializing an (N, N, dh) temporary).
    m_hi, m_lo = _split_f32(q_t * e_new * k_b)                # (B*N, ndh)
    sel = sel_ref[...]                                        # (ndh, N), bf16, exact
    att_all = (jnp.dot(m_hi, sel, preferred_element_type=f32)
               + jnp.dot(m_lo, sel, preferred_element_type=f32))   # (B*N, N)

    v_hi, v_lo = _split_f32(v_p)

    # Per-batch softmax over i (sublane axis) == torch.softmax(dim=1),
    # then x_out = Att @ V.  B is tiny -> unrolled at trace time.
    # TODO(synk): drop_att has p=0.0 in the reference module -> identity here;
    # wire in pltpu PRNG masking if a nonzero dropout rate is ever needed.
    for b in range(B):
        r0, r1 = b * N, (b + 1) * N
        att = att_all[r0:r1, :]                               # (N, N): rows = i
        att = att - jnp.max(att, axis=0, keepdims=True)
        att = jnp.exp(att)
        att = att * pl.reciprocal(jnp.sum(att, axis=0, keepdims=True),
                                  approx=True)
        a_hi, a_lo = _split_f32(att)
        xout_ref[r0:r1, :] = _dot3(a_hi, a_lo, v_hi[r0:r1, :], v_lo[r0:r1, :])


def make_fused_params(params, N):
    """One-time (module-init) fusion / retiling of the six Linear layers.

    Kept out of the per-call path per the performance review.
    """
    d, dh = params["Wq"].shape
    ndh = N * dh
    f32 = jnp.float32
    eye = jnp.eye(N, dtype=f32)

    tile_cols = lambda a: jnp.tile(a.astype(f32), (1, N))          # (r,dh)->(r,N*dh)
    blk_diag  = lambda a: jnp.kron(eye, a.astype(f32))             # (d,dh)->(N*d,N*dh)
    pad_lanes = lambda a: jnp.pad(a.astype(f32), ((0, 0), (0, ndh - dh)))

    # x-side fused projection: [tile(Wq) | tile(Wni) | pad(Wv)]
    w_x = jnp.concatenate([tile_cols(params["Wq"]),
                           tile_cols(params["Wni"]),
                           pad_lanes(params["Wv"])], axis=1)        # (d, 3*ndh)
    b_x = jnp.concatenate([tile_cols(params["bq"]),
                           tile_cols(params["bni"]),
                           pad_lanes(params["bv"])], axis=1)        # (1, 3*ndh)

    # row/edge fused projection: [kron(I,Wk) | kron(I,Wnj) | kron(I,We)]
    w_re = jnp.concatenate([blk_diag(params["Wk"]),
                            blk_diag(params["Wnj"]),
                            blk_diag(params["We"])], axis=1)        # (N*d, 3*ndh)
    b_re = jnp.concatenate([tile_cols(params["bk"]),
                            tile_cols(params["bnj"]),
                            tile_cols(params["be"])], axis=1)       # (1, 3*ndh)

    # bf16 hi/lo halves for the manual bf16_3x matmuls (same bytes as f32).
    w_x_hi, w_x_lo = _split_f32(w_x)
    w_re_hi, w_re_lo = _split_f32(w_re)

    # 0/1 segment-sum selection matrix (lane j*dh+k -> column j), pre-scaled
    # by 1/sqrt(d_head) (0.25 for dh=16: exact in bf16).
    grp = np.arange(ndh) // dh
    sel = (grp[:, None] == np.arange(N)[None, :]).astype(np.float32) / np.sqrt(dh)
    sel = jnp.asarray(sel, dtype=jnp.bfloat16)

    return dict(w_x_hi=w_x_hi, w_x_lo=w_x_lo, b_x=b_x,
                w_re_hi=w_re_hi, w_re_lo=w_re_lo, b_re=b_re, sel=sel)


def _full_spec(shape):
    n = len(shape)
    return pl.BlockSpec(shape, lambda i: (0,) * n)


@functools.partial(jax.jit, static_argnames=("d_head",))
def head_attention(x, e, fused, *, d_head):
    B, N, d = x.shape
    dh = d_head
    ndh = N * dh

    # Lane-dense input slabs (cheap reshapes; fused into one jit program).
    xs = x.reshape(B * N, d)
    e_dense = e.reshape(B * N, N * d)
    x_rep = jnp.broadcast_to(x.reshape(B, 1, N * d),
                             (B, N, N * d)).reshape(B * N, N * d)
    rowe = jnp.concatenate([e_dense, x_rep], axis=0)        # (2*B*N, N*d)

    inputs = (xs, rowe,
              fused["w_x_hi"], fused["w_x_lo"], fused["b_x"],
              fused["w_re_hi"], fused["w_re_lo"], fused["b_re"],
              fused["sel"])

    kernel = functools.partial(head_attention_kernel, B=B, N=N, d_head=dh)

    flops = 2 * (3 * (B * N) * d * (3 * ndh)             # px: 3 bf16 passes
                 + 3 * (2 * B * N) * (N * d) * (3 * ndh) # pre: 3 bf16 passes
                 + 2 * (B * N) * ndh * N                 # m @ sel: 2 passes
                 + 3 * B * N * N * ndh)                  # att @ V: 3 passes/batch
    bytes_accessed = (sum(int(np.prod(a.shape)) * a.dtype.itemsize for a in inputs)
                      + 2 * B * N * ndh * 4)

    x_out_pad, e_out_dense = pl.pallas_call(
        kernel,
        grid=(1,),           # single step: both batch elements, weights DMA'd once
        in_specs=[_full_spec(a.shape) for a in inputs],
        out_specs=(_full_spec((B * N, ndh)), _full_spec((B * N, ndh))),
        out_shape=(jax.ShapeDtypeStruct((B * N, ndh), jnp.float32),
                   jax.ShapeDtypeStruct((B * N, ndh), jnp.float32)),
        compiler_params=pltpu.CompilerParams(
            dimension_semantics=("arbitrary",),
            vmem_limit_bytes=32 * 1024 * 1024,
        ),
        cost_estimate=pl.CostEstimate(
            flops=int(flops),
            transcendentals=int(B * N * N),
            bytes_accessed=int(bytes_accessed),
        ),
    )(*inputs)

    # Undo the lane-dense output layouts outside the kernel.
    x_out = x_out_pad[:, :dh].reshape(B, N, dh)
    e_out = e_out_dense.reshape(B, N, N, dh)
    return x_out, e_out


def ref_forward(x, e, p):
    """Pure-JAX reference mirroring the PyTorch forward."""
    hp = jax.lax.Precision.HIGHEST
    dh = p["Wq"].shape[1]
    Q = jnp.dot(x, p["Wq"], precision=hp) + p["bq"]
    K = jnp.dot(x, p["Wk"], precision=hp) + p["bk"]
    V = jnp.dot(x, p["Wv"], precision=hp) + p["bv"]
    E = jnp.einsum("bijc,ck->bijk", e, p["We"], precision=hp) + p["be"]
    Ni = jnp.dot(x, p["Wni"], precision=hp) + p["bni"]
    Nj = jnp.dot(x, p["Wnj"], precision=hp) + p["bnj"]
    e_new = Ni[:, :, None, :] + Nj[:, None, :, :] + E
    att = jnp.sum(Q[:, :, None, :] * e_new * K[:, None, :, :], axis=3)
    att = att / jnp.sqrt(jnp.float32(dh))
    att = jax.nn.softmax(att, axis=1)            # PyTorch dim=1
    out = jnp.einsum("bij,bjk->bik", att, V, precision=hp)
    return out, e_new


def make_params(key, d, d_head):
    names = ["q", "k", "e", "v", "ni", "nj"]
    keys = jax.random.split(key, 2 * len(names))
    scale = 1.0 / np.sqrt(d)
    params = {}
    for i, n in enumerate(names):
        params["W" + n] = jax.random.uniform(keys[2 * i], (d, d_head),
                                             jnp.float32, -scale, scale)
        params["b" + n] = jax.random.uniform(keys[2 * i + 1], (1, d_head),
                                             jnp.float32, -scale, scale)
    return params


if __name__ == "__main__":
    B, N, d, d_head = 2, 8, 32, 16   # small shapes; N*d_head = 128 (lane-dense)

    key = jax.random.PRNGKey(0)
    kx, ke, kp = jax.random.split(key, 3)
    x = jax.random.normal(kx, (B, N, d), jnp.float32)
    e = jax.random.normal(ke, (B, N, N, d), jnp.float32)
    params = make_params(kp, d, d_head)

    # One-time weight fusion (module init), outside the per-call hot path.
    fused = make_fused_params(params, N)

    x_out, e_out = head_attention(x, e, fused, d_head=d_head)
    jax.block_until_ready((x_out, e_out))

    x_ref, e_ref = ref_forward(x, e, params)
    # e_out goes through manual bf16_3x matmuls (no softmax / approx ops):
    # errors are O(1e-5); 1e-4 gives comfortable margin.
    np.testing.assert_allclose(np.asarray(e_out), np.asarray(e_ref),
                               rtol=1e-4, atol=1e-4)
    # x_out additionally goes through pl.reciprocal(approx=True) (EUP vrcp).
    np.testing.assert_allclose(np.asarray(x_out), np.asarray(x_ref),
                               rtol=5e-3, atol=5e-3)

    print("KERNEL_OK")
</pallas_src>

<mosaic_0001>
module attributes {stable_mosaic.version = 11 : i64} {
  func.func @head_attention_kernel(%arg0: i32, %arg1: memref<16x32xf32, #tpu.memory_space<vmem>>, %arg2: memref<32x256xf32, #tpu.memory_space<vmem>>, %arg3: memref<32x384xbf16, #tpu.memory_space<vmem>>, %arg4: memref<32x384xbf16, #tpu.memory_space<vmem>>, %arg5: memref<1x384xf32, #tpu.memory_space<vmem>>, %arg6: memref<256x384xbf16, #tpu.memory_space<vmem>>, %arg7: memref<256x384xbf16, #tpu.memory_space<vmem>>, %arg8: memref<1x384xf32, #tpu.memory_space<vmem>>, %arg9: memref<128x8xbf16, #tpu.memory_space<vmem>>, %arg10: memref<16x128xf32, #tpu.memory_space<vmem>>, %arg11: memref<16x128xf32, #tpu.memory_space<vmem>>) attributes {dimension_semantics = [#tpu.dimension_semantics<arbitrary>], iteration_bounds = array<i64: 1>, scalar_prefetch = 0 : i64, scratch_operands = 0 : i64, tpu.core_type = #tpu.core_type<tc>, window_params = [{pipeline_mode = #tpu.pipeline_mode<synchronous>, transform_indices = @transform_0, window_bounds = array<i64: 16, 32>}, {pipeline_mode = #tpu.pipeline_mode<synchronous>, transform_indices = @transform_1, window_bounds = array<i64: 32, 256>}, {pipeline_mode = #tpu.pipeline_mode<synchronous>, transform_indices = @transform_2, window_bounds = array<i64: 32, 384>}, {pipeline_mode = #tpu.pipeline_mode<synchronous>, transform_indices = @transform_3, window_bounds = array<i64: 32, 384>}, {pipeline_mode = #tpu.pipeline_mode<synchronous>, transform_indices = @transform_4, window_bounds = array<i64: 1, 384>}, {pipeline_mode = #tpu.pipeline_mode<synchronous>, transform_indices = @transform_5, window_bounds = array<i64: 256, 384>}, {pipeline_mode = #tpu.pipeline_mode<synchronous>, transform_indices = @transform_6, window_bounds = array<i64: 256, 384>}, {pipeline_mode = #tpu.pipeline_mode<synchronous>, transform_indices = @transform_7, window_bounds = array<i64: 1, 384>}, {pipeline_mode = #tpu.pipeline_mode<synchronous>, transform_indices = @transform_8, window_bounds = array<i64: 128, 8>}, {pipeline_mode = #tpu.pipeline_mode<synchronous>, transform_indices = @transform_9, window_bounds = array<i64: 16, 128>}, {pipeline_mode = #tpu.pipeline_mode<synchronous>, transform_indices = @transform_10, window_bounds = array<i64: 16, 128>}]} {
    %c0 = arith.constant 0 : index
    %c0_0 = arith.constant 0 : index
    %0 = vector.load %arg1[%c0, %c0_0] : memref<16x32xf32, #tpu.memory_space<vmem>>, vector<16x32xf32>
    %1 = arith.truncf %0 : vector<16x32xf32> to vector<16x32xbf16>
    %2 = arith.extf %1 : vector<16x32xbf16> to vector<16x32xf32>
    %3 = arith.subf %0, %2 : vector<16x32xf32>
    %4 = arith.truncf %3 : vector<16x32xf32> to vector<16x32xbf16>
    %c0_1 = arith.constant 0 : index
    %c0_2 = arith.constant 0 : index
    %5 = vector.load %arg3[%c0_1, %c0_2] : memref<32x384xbf16, #tpu.memory_space<vmem>>, vector<32x384xbf16>
    %c0_3 = arith.constant 0 : index
    %c0_4 = arith.constant 0 : index
    %6 = vector.load %arg4[%c0_3, %c0_4] : memref<32x384xbf16, #tpu.memory_space<vmem>>, vector<32x384xbf16>
    %cst = arith.constant dense<0.000000e+00> : vector<16x384xf32>
    %7 = tpu.matmul %1, %5, %cst {dimension_numbers = #tpu.dot_dimension_numbers<[1], [0], [0], [1], [0, 0, 1, 1], [], []>} : vector<16x32xbf16>, vector<32x384xbf16>, vector<16x384xf32> -> vector<16x384xf32>
    %cst_5 = arith.constant dense<0.000000e+00> : vector<16x384xf32>
    %8 = tpu.matmul %4, %5, %cst_5 {dimension_numbers = #tpu.dot_dimension_numbers<[1], [0], [0], [1], [0, 0, 1, 1], [], []>} : vector<16x32xbf16>, vector<32x384xbf16>, vector<16x384xf32> -> vector<16x384xf32>
    %9 = arith.addf %7, %8 : vector<16x384xf32>
    %cst_6 = arith.constant dense<0.000000e+00> : vector<16x384xf32>
    %10 = tpu.matmul %1, %6, %cst_6 {dimension_numbers = #tpu.dot_dimension_numbers<[1], [0], [0], [1], [0, 0, 1, 1], [], []>} : vector<16x32xbf16>, vector<32x384xbf16>, vector<16x384xf32> -> vector<16x384xf32>
    %11 = arith.addf %9, %10 : vector<16x384xf32>
    %c0_7 = arith.constant 0 : index
    %c0_8 = arith.constant 0 : index
    %12 = vector.load %arg5[%c0_7, %c0_8] : memref<1x384xf32, #tpu.memory_space<vmem>>, vector<1x384xf32>
    %13 = vector.broadcast %12 : vector<1x384xf32> to vector<16x384xf32>
    %14 = arith.addf %11, %13 : vector<16x384xf32>
    %15 = vector.extract_strided_slice %14 {offsets = [0, 0], sizes = [16, 128], strides = [1, 1]} : vector<16x384xf32> to vector<16x128xf32>
    %16 = vector.extract_strided_slice %14 {offsets = [0, 128], sizes = [16, 128], strides = [1, 1]} : vector<16x384xf32> to vector<16x128xf32>
    %17 = vector.extract_strided_slice %14 {offsets = [0, 256], sizes = [16, 128], strides = [1, 1]} : vector<16x384xf32> to vector<16x128xf32>
    %c0_9 = arith.constant 0 : index
    %c0_10 = arith.constant 0 : index
    %18 = vector.load %arg2[%c0_9, %c0_10] : memref<32x256xf32, #tpu.memory_space<vmem>>, vector<32x256xf32>
    %19 = arith.truncf %18 : vector<32x256xf32> to vector<32x256xbf16>
    %20 = arith.extf %19 : vector<32x256xbf16> to vector<32x256xf32>
    %21 = arith.subf %18, %20 : vector<32x256xf32>
    %22 = arith.truncf %21 : vector<32x256xf32> to vector<32x256xbf16>
    %c0_11 = arith.constant 0 : index
    %c0_12 = arith.constant 0 : index
    %23 = vector.load %arg6[%c0_11, %c0_12] : memref<256x384xbf16, #tpu.memory_space<vmem>>, vector<256x384xbf16>
    %c0_13 = arith.constant 0 : index
    %c0_14 = arith.constant 0 : index
    %24 = vector.load %arg7[%c0_13, %c0_14] : memref<256x384xbf16, #tpu.memory_space<vmem>>, vector<256x384xbf16>
    %cst_15 = arith.constant dense<0.000000e+00> : vector<32x384xf32>
    %25 = tpu.matmul %19, %23, %cst_15 {dimension_numbers = #tpu.dot_dimension_numbers<[1], [0], [0], [1], [0, 0, 1, 1], [], []>} : vector<32x256xbf16>, vector<256x384xbf16>, vector<32x384xf32> -> vector<32x384xf32>
    %cst_16 = arith.constant dense<0.000000e+00> : vector<32x384xf32>
    %26 = tpu.matmul %22, %23, %cst_16 {dimension_numbers = #tpu.dot_dimension_numbers<[1], [0], [0], [1], [0, 0, 1, 1], [], []>} : vector<32x256xbf16>, vector<256x384xbf16>, vector<32x384xf32> -> vector<32x384xf32>
    %27 = arith.addf %25, %26 : vector<32x384xf32>
    %cst_17 = arith.constant dense<0.000000e+00> : vector<32x384xf32>
    %28 = tpu.matmul %19, %24, %cst_17 {dimension_numbers = #tpu.dot_dimension_numbers<[1], [0], [0], [1], [0, 0, 1, 1], [], []>} : vector<32x256xbf16>, vector<256x384xbf16>, vector<32x384xf32> -> vector<32x384xf32>
    %29 = arith.addf %27, %28 : vector<32x384xf32>
    %c0_18 = arith.constant 0 : index
    %c0_19 = arith.constant 0 : index
    %30 = vector.load %arg8[%c0_18, %c0_19] : memref<1x384xf32, #tpu.memory_space<vmem>>, vector<1x384xf32>
    %31 = vector.broadcast %30 : vector<1x384xf32> to vector<32x384xf32>
    %32 = arith.addf %29, %31 : vector<32x384xf32>
    %33 = vector.extract_strided_slice %32 {offsets = [16, 0], sizes = [16, 128], strides = [1, 1]} : vector<32x384xf32> to vector<16x128xf32>
    %34 = vector.extract_strided_slice %32 {offsets = [16, 128], sizes = [16, 128], strides = [1, 1]} : vector<32x384xf32> to vector<16x128xf32>
    %35 = vector.extract_strided_slice %32 {offsets = [0, 256], sizes = [16, 128], strides = [1, 1]} : vector<32x384xf32> to vector<16x128xf32>
    %36 = arith.addf %35, %16 : vector<16x128xf32>
    %37 = arith.addf %36, %34 : vector<16x128xf32>
    %c0_20 = arith.constant 0 : index
    %c0_21 = arith.constant 0 : index
    %38 = vector.load %arg11[%c0_20, %c0_21] : memref<16x128xf32, #tpu.memory_space<vmem>>, vector<16x128xf32>
    tpu.vector_store %arg11[%c0_20, %c0_21], %37 {strides = array<i32>} : memref<16x128xf32, #tpu.memory_space<vmem>>, vector<16x128xf32>,
    %39 = arith.mulf %15, %37 : vector<16x128xf32>
    %40 = arith.mulf %39, %33 : vector<16x128xf32>
    %41 = arith.truncf %40 : vector<16x128xf32> to vector<16x128xbf16>
    %42 = arith.extf %41 : vector<16x128xbf16> to vector<16x128xf32>
    %43 = arith.subf %40, %42 : vector<16x128xf32>
    %44 = arith.truncf %43 : vector<16x128xf32> to vector<16x128xbf16>
    %c0_22 = arith.constant 0 : index
    %c0_23 = arith.constant 0 : index
    %45 = vector.load %arg9[%c0_22, %c0_23] : memref<128x8xbf16, #tpu.memory_space<vmem>>, vector<128x8xbf16>
    %cst_24 = arith.constant dense<0.000000e+00> : vector<16x8xf32>
    %46 = tpu.matmul %41, %45, %cst_24 {dimension_numbers = #tpu.dot_dimension_numbers<[1], [0], [0], [1], [0, 0, 1, 1], [], []>} : vector<16x128xbf16>, vector<128x8xbf16>, vector<16x8xf32> -> vector<16x8xf32>
    %cst_25 = arith.constant dense<0.000000e+00> : vector<16x8xf32>
    %47 = tpu.matmul %44, %45, %cst_25 {dimension_numbers = #tpu.dot_dimension_numbers<[1], [0], [0], [1], [0, 0, 1, 1], [], []>} : vector<16x128xbf16>, vector<128x8xbf16>, vector<16x8xf32> -> vector<16x8xf32>
    %48 = arith.addf %46, %47 : vector<16x8xf32>
    %49 = arith.truncf %17 : vector<16x128xf32> to vector<16x128xbf16>
    %50 = arith.extf %49 : vector<16x128xbf16> to vector<16x128xf32>
    %51 = arith.subf %17, %50 : vector<16x128xf32>
    %52 = arith.truncf %51 : vector<16x128xf32> to vector<16x128xbf16>
    %53 = vector.extract_strided_slice %48 {offsets = [0, 0], sizes = [8, 8], strides = [1, 1]} : vector<16x8xf32> to vector<8x8xf32>
    %cst_26 = arith.constant dense<0xFF800000> : vector<8xf32>
    %54 = vector.multi_reduction <maximumf>, %53, %cst_26 [0] : vector<8x8xf32> to vector<8xf32>
    %55 = vector.shape_cast %54 : vector<8xf32> to vector<1x8xf32>
    %56 = vector.broadcast %55 : vector<1x8xf32> to vector<8x8xf32>
    %57 = arith.subf %53, %56 : vector<8x8xf32>
    %58 = math.exp %57 : vector<8x8xf32>
    %cst_27 = arith.constant dense<0.000000e+00> : vector<8xf32>
    %59 = vector.multi_reduction <add>, %58, %cst_27 [0] : vector<8x8xf32> to vector<8xf32>
    %60 = vector.shape_cast %59 : vector<8xf32> to vector<1x8xf32>
    %61 = tpu.reciprocal %60 {approx = true} : vector<1x8xf32> -> vector<1x8xf32>
    %62 = vector.broadcast %61 : vector<1x8xf32> to vector<8x8xf32>
    %63 = arith.mulf %58, %62 : vector<8x8xf32>
    %64 = arith.truncf %63 : vector<8x8xf32> to vector<8x8xbf16>
    %65 = arith.extf %64 : vector<8x8xbf16> to vector<8x8xf32>
    %66 = arith.subf %63, %65 : vector<8x8xf32>
    %67 = arith.truncf %66 : vector<8x8xf32> to vector<8x8xbf16>
    %68 = vector.extract_strided_slice %49 {offsets = [0, 0], sizes = [8, 128], strides = [1, 1]} : vector<16x128xbf16> to vector<8x128xbf16>
    %69 = vector.extract_strided_slice %52 {offsets = [0, 0], sizes = [8, 128], strides = [1, 1]} : vector<16x128xbf16> to vector<8x128xbf16>
    %cst_28 = arith.constant dense<0.000000e+00> : vector<8x128xf32>
    %70 = tpu.matmul %64, %68, %cst_28 {dimension_numbers = #tpu.dot_dimension_numbers<[1], [0], [0], [1], [0, 0, 1, 1], [], []>} : vector<8x8xbf16>, vector<8x128xbf16>, vector<8x128xf32> -> vector<8x128xf32>
    %cst_29 = arith.constant dense<0.000000e+00> : vector<8x128xf32>
    %71 = tpu.matmul %67, %68, %cst_29 {dimension_numbers = #tpu.dot_dimension_numbers<[1], [0], [0], [1], [0, 0, 1, 1], [], []>} : vector<8x8xbf16>, vector<8x128xbf16>, vector<8x128xf32> -> vector<8x128xf32>
    %72 = arith.addf %70, %71 : vector<8x128xf32>
    %cst_30 = arith.constant dense<0.000000e+00> : vector<8x128xf32>
    %73 = tpu.matmul %64, %69, %cst_30 {dimension_numbers = #tpu.dot_dimension_numbers<[1], [0], [0], [1], [0, 0, 1, 1], [], []>} : vector<8x8xbf16>, vector<8x128xbf16>, vector<8x128xf32> -> vector<8x128xf32>
    %74 = arith.addf %72, %73 : vector<8x128xf32>
    %c0_31 = arith.constant 0 : index
    %c0_32 = arith.constant 0 : index
    %75 = vector.load %arg10[%c0_31, %c0_32] : memref<16x128xf32, #tpu.memory_space<vmem>>, vector<8x128xf32>
    tpu.vector_store %arg10[%c0_31, %c0_32], %74 {strides = array<i32>} : memref<16x128xf32, #tpu.memory_space<vmem>>, vector<8x128xf32>,
    %76 = vector.extract_strided_slice %48 {offsets = [8, 0], sizes = [8, 8], strides = [1, 1]} : vector<16x8xf32> to vector<8x8xf32>
    %cst_33 = arith.constant dense<0xFF800000> : vector<8xf32>
    %77 = vector.multi_reduction <maximumf>, %76, %cst_33 [0] : vector<8x8xf32> to vector<8xf32>
    %78 = vector.shape_cast %77 : vector<8xf32> to vector<1x8xf32>
    %79 = vector.broadcast %78 : vector<1x8xf32> to vector<8x8xf32>
    %80 = arith.subf %76, %79 : vector<8x8xf32>
    %81 = math.exp %80 : vector<8x8xf32>
    %cst_34 = arith.constant dense<0.000000e+00> : vector<8xf32>
    %82 = vector.multi_reduction <add>, %81, %cst_34 [0] : vector<8x8xf32> to vector<8xf32>
    %83 = vector.shape_cast %82 : vector<8xf32> to vector<1x8xf32>
    %84 = tpu.reciprocal %83 {approx = true} : vector<1x8xf32> -> vector<1x8xf32>
    %85 = vector.broadcast %84 : vector<1x8xf32> to vector<8x8xf32>
    %86 = arith.mulf %81, %85 : vector<8x8xf32>
    %87 = arith.truncf %86 : vector<8x8xf32> to vector<8x8xbf16>
    %88 = arith.extf %87 : vector<8x8xbf16> to vector<8x8xf32>
    %89 = arith.subf %86, %88 : vector<8x8xf32>
    %90 = arith.truncf %89 : vector<8x8xf32> to vector<8x8xbf16>
    %91 = vector.extract_strided_slice %49 {offsets = [8, 0], sizes = [8, 128], strides = [1, 1]} : vector<16x128xbf16> to vector<8x128xbf16>
    %92 = vector.extract_strided_slice %52 {offsets = [8, 0], sizes = [8, 128], strides = [1, 1]} : vector<16x128xbf16> to vector<8x128xbf16>
    %cst_35 = arith.constant dense<0.000000e+00> : vector<8x128xf32>
    %93 = tpu.matmul %87, %91, %cst_35 {dimension_numbers = #tpu.dot_dimension_numbers<[1], [0], [0], [1], [0, 0, 1, 1], [], []>} : vector<8x8xbf16>, vector<8x128xbf16>, vector<8x128xf32> -> vector<8x128xf32>
    %cst_36 = arith.constant dense<0.000000e+00> : vector<8x128xf32>
    %94 = tpu.matmul %90, %91, %cst_36 {dimension_numbers = #tpu.dot_dimension_numbers<[1], [0], [0], [1], [0, 0, 1, 1], [], []>} : vector<8x8xbf16>, vector<8x128xbf16>, vector<8x128xf32> -> vector<8x128xf32>
    %95 = arith.addf %93, %94 : vector<8x128xf32>
    %cst_37 = arith.constant dense<0.000000e+00> : vector<8x128xf32>
    %96 = tpu.matmul %87, %92, %cst_37 {dimension_numbers = #tpu.dot_dimension_numbers<[1], [0], [0], [1], [0, 0, 1, 1], [], []>} : vector<8x8xbf16>, vector<8x128xbf16>, vector<8x128xf32> -> vector<8x128xf32>
    %97 = arith.addf %95, %96 : vector<8x128xf32>
    %c8 = arith.constant 8 : index
    %c0_38 = arith.constant 0 : index
    %98 = vector.load %arg10[%c8, %c0_38] : memref<16x128xf32, #tpu.memory_space<vmem>>, vector<8x128xf32>
    tpu.vector_store %arg10[%c8, %c0_38], %97 {strides = array<i32>} : memref<16x128xf32, #tpu.memory_space<vmem>>, vector<8x128xf32>,
    return
  }
  func.func @transform_0(%arg0: i32) -> (i32, i32) {
    %c0_i32 = arith.constant 0 : i32
    %c0_i32_0 = arith.constant 0 : i32
    %c0_i32_1 = arith.constant 0 : i32
    return %c0_i32, %c0_i32_0 : i32, i32
  }
  func.func @transform_1(%arg0: i32) -> (i32, i32) {
    %c0_i32 = arith.constant 0 : i32
    %c0_i32_0 = arith.constant 0 : i32
    %c0_i32_1 = arith.constant 0 : i32
    return %c0_i32, %c0_i32_0 : i32, i32
  }
  func.func @transform_2(%arg0: i32) -> (i32, i32) {
    %c0_i32 = arith.constant 0 : i32
    %c0_i32_0 = arith.constant 0 : i32
    %c0_i32_1 = arith.constant 0 : i32
    return %c0_i32, %c0_i32_0 : i32, i32
  }
  func.func @transform_3(%arg0: i32) -> (i32, i32) {
    %c0_i32 = arith.constant 0 : i32
    %c0_i32_0 = arith.constant 0 : i32
    %c0_i32_1 = arith.constant 0 : i32
    return %c0_i32, %c0_i32_0 : i32, i32
  }
  func.func @transform_4(%arg0: i32) -> (i32, i32) {
    %c0_i32 = arith.constant 0 : i32
    %c0_i32_0 = arith.constant 0 : i32
    %c0_i32_1 = arith.constant 0 : i32
    return %c0_i32, %c0_i32_0 : i32, i32
  }
  func.func @transform_5(%arg0: i32) -> (i32, i32) {
    %c0_i32 = arith.constant 0 : i32
    %c0_i32_0 = arith.constant 0 : i32
    %c0_i32_1 = arith.constant 0 : i32
    return %c0_i32, %c0_i32_0 : i32, i32
  }
  func.func @transform_6(%arg0: i32) -> (i32, i32) {
    %c0_i32 = arith.constant 0 : i32
    %c0_i32_0 = arith.constant 0 : i32
    %c0_i32_1 = arith.constant 0 : i32
    return %c0_i32, %c0_i32_0 : i32, i32
  }
  func.func @transform_7(%arg0: i32) -> (i32, i32) {
    %c0_i32 = arith.constant 0 : i32
    %c0_i32_0 = arith.constant 0 : i32
    %c0_i32_1 = arith.constant 0 : i32
    return %c0_i32, %c0_i32_0 : i32, i32
  }
  func.func @transform_8(%arg0: i32) -> (i32, i32) {
    %c0_i32 = arith.constant 0 : i32
    %c0_i32_0 = arith.constant 0 : i32
    %c0_i32_1 = arith.constant 0 : i32
    return %c0_i32, %c0_i32_0 : i32, i32
  }
  func.func @transform_9(%arg0: i32) -> (i32, i32) {
    %c0_i32 = arith.constant 0 : i32
    %c0_i32_0 = arith.constant 0 : i32
    %c0_i32_1 = arith.constant 0 : i32
    return %c0_i32, %c0_i32_0 : i32, i32
  }
  func.func @transform_10(%arg0: i32) -> (i32, i32) {
    %c0_i32 = arith.constant 0 : i32
    %c0_i32_0 = arith.constant 0 : i32
    %c0_i32_1 = arith.constant 0 : i32
    return %c0_i32, %c0_i32_0 : i32, i32
  }
}

</mosaic_0001>

<llo_original>
// kernel: head_attention.1
$region0: #{head_attention.1}
  #allocation0 [shape = 'u32[]', space=smem, size = 0x4, offset = 0x4, fixed_abs, tag = 'smem constant byte address 0x4 - core index']
  #allocation1 [shape = 'u32[144,128]{1,0:T(1,128)}', space=vmem, size = 0x12000, scoped, tag = 'internal scratch']
  %s0 = inlined_call_operand.vmem [shape: f32[16,32], index: 0, kind: input, shape index: {}]
  %s1 = inlined_call_operand.vmem [shape: f32[32,256], index: 1, kind: input, shape index: {}]
  %s2 = inlined_call_operand.hbm [shape: bf16[32,384], index: 2, kind: input, shape index: {}]
  %s3 = inlined_call_operand.hbm [shape: bf16[32,384], index: 3, kind: input, shape index: {}]
  %s4 = inlined_call_operand.vmem [shape: f32[1,384], index: 4, kind: input, shape index: {}]
  %s5 = inlined_call_operand.vmem [shape: bf16[256,384], index: 5, kind: input, shape index: {}]
  %s6 = inlined_call_operand.hbm [shape: bf16[256,384], index: 6, kind: input, shape index: {}]
  %s7 = inlined_call_operand.vmem [shape: f32[1,384], index: 7, kind: input, shape index: {}]
  %s8 = inlined_call_operand.vmem [shape: bf16[128,8], index: 8, kind: input, shape index: {}]
  %s9 = inlined_call_operand.vmem [shape: f32[16,128], index: 9, kind: output, shape index: {0}]
  %s10 = inlined_call_operand.vmem [shape: f32[16,128], index: 10, kind: output, shape index: {1}]
  %11 = xla_tuple %s9, %s10
  %s12 = sld [smem:[#allocation0]]
  $region66: #{head_attention.1} parent=0
    _
  %s14 = ssub.s32 1, %s12
  %s15 = scalar_select 0, %s14, %s12
  $region1: #{head_attention.1} parent=0
    #allocation2 [shape = 'u8[24576]{0}', space=vmem, size = 0x6000, scoped, tag = 'input window, operand 2, single buffered']
    #allocation3 [shape = 's32[1]{0}', space=sflag, size = 0x4, scoped, tag = 'scoped memory for head_attention.1']
    #allocation4 [shape = 'u8[24576]{0}', space=vmem, size = 0x6000, scoped, tag = 'input window, operand 3, single buffered']
    #allocation5 [shape = 's32[1]{0}', space=sflag, size = 0x4, scoped, tag = 'scoped memory for head_attention.1']
    #allocation6 [shape = 'u8[196608]{0}', space=vmem, size = 0x30000, scoped, tag = 'input window, operand 6, single buffered']
    %16 = vsyncpa [#allocation3], 0
    %17 = vsyncpa [#allocation5], 0
    // Predicated region
    $region2: #{head_attention.1} parent=1 // pred_check
      _
    $region3: #{head_attention.1} parent=1 // pred_check_branch
      %19 = sbr.rel (0) target = $region5
    $region4: #{head_attention.1} parent=1 // pred_region
      _
    $region5: #{head_attention.1} parent=1 // pred_fallthru
      _
    // Predicated region
    $region6: #{head_attention.1} parent=1 // pred_check
      _
    $region7: #{head_attention.1} parent=1 // pred_check_branch
      %21 = sbr.rel (0) target = $region9
    $region8: #{head_attention.1} parent=1 // pred_region
      _
    $region9: #{head_attention.1} parent=1 // pred_fallthru
      _
    // Predicated region
    $region10: #{head_attention.1} parent=1 // pred_check
      _
    $region11: #{head_attention.1} parent=1 // pred_check_branch
      %23 = sbr.rel (0) target = $region13
    $region12: #{head_attention.1} parent=1 // pred_region
      %s25 = ssub.s32 768, 768
      %26 = vsyncadd [#allocation3], %s25
      %s27 = sshll.u32 [#allocation2], 4
      %s28 = int_to_ptr.vmem [resolvable:$true] %s27
      %33 = dma.hbm_to_vmem [thread:$0]  %s2, 768, %s28, [#allocation3], 192, 192, 12
    $region13: #{head_attention.1} parent=1 // pred_fallthru
      _
    // Predicated region
    $region14: #{head_attention.1} parent=1 // pred_check
      _
    $region15: #{head_attention.1} parent=1 // pred_check_branch
      %35 = sbr.rel (0) target = $region17
    $region16: #{head_attention.1} parent=1 // pred_region
      %s37 = ssub.s32 768, 768
      %38 = vsyncadd [#allocation5], %s37
      %s39 = sshll.u32 [#allocation4], 4
      %s40 = int_to_ptr.vmem [resolvable:$true] %s39
      %45 = dma.hbm_to_vmem [thread:$0]  %s3, 768, %s40, [#allocation5], 192, 192, 12
    $region17: #{head_attention.1} parent=1 // pred_fallthru
      _
    // Predicated region
    $region18: #{head_attention.1} parent=1 // pred_check
      _
    $region19: #{head_attention.1} parent=1 // pred_check_branch
      %47 = sbr.rel (0) target = $region21
    $region20: #{head_attention.1} parent=1 // pred_region
      _
    $region21: #{head_attention.1} parent=1 // pred_fallthru
      _
    // Predicated region
    $region22: #{head_attention.1} parent=1 // pred_check
      _
    $region23: #{head_attention.1} parent=1 // pred_check_branch
      %49 = sbr.rel (0) target = $region25
    $region24: #{head_attention.1} parent=1 // pred_region
      _
    $region25: #{head_attention.1} parent=1 // pred_fallthru
      _
    // Predicated region
    $region26: #{head_attention.1} parent=1 // pred_check
      _
    $region27: #{head_attention.1} parent=1 // pred_check_branch
      %51 = sbr.rel (0) target = $region29
    $region28: #{head_attention.1} parent=1 // pred_region
      %s53 = ssub.s32 6144, 6144
      %54 = vsyncadd [#allocation5], %s53
      %s55 = sshll.u32 [#allocation6], 4
      %s56 = int_to_ptr.vmem [resolvable:$true] %s55
      %61 = dma.hbm_to_vmem [thread:$0]  %s6, 6144, %s56, [#allocation5], 192, 192, 12
    $region29: #{head_attention.1} parent=1 // pred_fallthru
      _
    // Predicated region
    $region30: #{head_attention.1} parent=1 // pred_check
      _
    $region31: #{head_attention.1} parent=1 // pred_check_branch
      %63 = sbr.rel (0) target = $region33
    $region32: #{head_attention.1} parent=1 // pred_region
      _
    $region33: #{head_attention.1} parent=1 // pred_fallthru
      _
    // Predicated region
    $region34: #{head_attention.1} parent=1 // pred_check
      _
    $region35: #{head_attention.1} parent=1 // pred_check_branch
      %65 = sbr.rel (0) target = $region37
    $region36: #{head_attention.1} parent=1 // pred_region
      _
    $region37: #{head_attention.1} parent=1 // pred_fallthru
      _
    // Predicated region
    $region38: #{head_attention.1} parent=1 // pred_check
      _
    $region39: #{head_attention.1} parent=1 // pred_check_branch
      %67 = sbr.rel (0) target = $region41
    $region40: #{head_attention.1} parent=1 // pred_region
      %68 = dma.done [#allocation3], 768
    $region41: #{head_attention.1} parent=1 // pred_fallthru
      _
    // Predicated region
    $region42: #{head_attention.1} parent=1 // pred_check
      _
    $region43: #{head_attention.1} parent=1 // pred_check_branch
      %70 = sbr.rel (0) target = $region45
    $region44: #{head_attention.1} parent=1 // pred_region
      %71 = dma.done [#allocation5], 768
    $region45: #{head_attention.1} parent=1 // pred_fallthru
      _
    // Predicated region
    $region46: #{head_attention.1} parent=1 // pred_check
      _
    $region47: #{head_attention.1} parent=1 // pred_check_branch
      %73 = sbr.rel (0) target = $region49
    $region48: #{head_attention.1} parent=1 // pred_region
      %74 = dma.done [#allocation5], 6144
    $region49: #{head_attention.1} parent=1 // pred_fallthru
      _
    %v76 = vld [vmem:[%s0] sm:$0xff]
    %v77 = vld [vmem:[%s0 + $0x8] sm:$0xff]
    %v78 = vpack.c.bf16 %v77, %v76
    %v79 = vunpack.c.l.bf16 %v78
    %v80 = vunpack.c.h.bf16 %v78
    %v81 = vsub.f32 %v76, %v79
    %v82 = vsub.f32 %v77, %v80
    %v83 = vpack.c.bf16 %v82, %v81
    %v84 = vld [vmem:[#allocation2] sm:$0xff]
    %v85 = vld [vmem:[#allocation2 + $0x8] sm:$0xf]
    %v86 = vld [vmem:[#allocation2 + $0xc] sm:$0xff]
    %v87 = vld [vmem:[#allocation2 + $0x14] sm:$0xf]
    %v88 = vld [vmem:[#allocation2 + $0x18] sm:$0xff]
    %v89 = vld [vmem:[#allocation2 + $0x20] sm:$0xf]
    %v90 = vld [vmem:[#allocation2 + $0x24] sm:$0xff]
    %v91 = vld [vmem:[#allocation2 + $0x2c] sm:$0xf]
    %v92 = vld [vmem:[#allocation4] sm:$0xff]
    %v93 = vld [vmem:[#allocation4 + $0x8] sm:$0xf]
    %v94 = vld [vmem:[#allocation4 + $0xc] sm:$0xff]
    %v95 = vld [vmem:[#allocation4 + $0x14] sm:$0xf]
    %v96 = vld [vmem:[#allocation4 + $0x18] sm:$0xff]
    %v97 = vld [vmem:[#allocation4 + $0x20] sm:$0xf]
    %v98 = vld [vmem:[#allocation4 + $0x24] sm:$0xff]
    %v99 = vld [vmem:[#allocation4 + $0x2c] sm:$0xf]
    %v108 = vunpack.c.l.b16 %v84
    %v109 = vunpack.c.h.b16 %v84
    %v110 = vunpack.c.l.b16 %v85
    %v111 = vunpack.c.l.b16 %v86
    %v112 = vunpack.c.h.b16 %v86
    %v113 = vunpack.c.l.b16 %v87
    %v114 = vunpack.c.l.b16 %v88
    %v115 = vunpack.c.h.b16 %v88
    %v116 = vunpack.c.l.b16 %v89
    %v117 = vunpack.c.l.b16 %v90
    %v118 = vunpack.c.h.b16 %v90
    %v119 = vunpack.c.l.b16 %v91
    %v120 = vpack.c.b16 %v111, %v108
    %v121 = vpack.c.b16 %v112, %v109
    %v122 = vpack.c.b16 %v113, %v110
    %v123 = vpack.c.b16 %v117, %v114
    %v124 = vpack.c.b16 %v118, %v115
    %v125 = vpack.c.b16 %v119, %v116
    %vm132 = vcmask 261120
    %v134 = vsel %vm132, %v83, 0
    %136 = vmatprep.subr.bf16.mxu0 0
    %137 = vmatpush1.bf16.msra.mxu0 0
    %138 = vmatprep.subr.bf16.mxu0 0
    %139 = vmatpush1.bf16.msra.mxu0 0
    %140 = vmatprep.subr.bf16.mxu0 0
    %141 = vmatpush1.bf16.msra.mxu0 0
    %142 = vmatprep.subr.bf16.mxu0 0
    %143 = vmatpush1.bf16.msra.mxu0 0
    %144 = vmatprep.subr.bf16.mxu0 0
    %145 = vmatpush1.bf16.msra.mxu0 0
    %146 = vmatprep.subr.bf16.mxu0 0
    %147 = vmatpush1.bf16.msra.mxu0 0
    %148 = vmatprep.subr.bf16.mxu0 %v124
    %149 = vmatpush1.bf16.msra.mxu0 %v123
    %150 = vmatprep.subr.bf16.mxu0 %v121
    %151 = vmatpush1.bf16.msra.mxu0 %v120
    %152 = vmatprep.subr.bf16.mxu0 0
    %153 = vmatpush2.bf16.msra.mxu0 0
    %154 = vmatprep.subr.bf16.mxu0 0
    %155 = vmatpush2.bf16.msra.mxu0 0
    %156 = vmatprep.subr.bf16.mxu0 0
    %157 = vmatpush2.bf16.msra.mxu0 0
    %158 = vmatprep.subr.bf16.mxu0 0
    %159 = vmatpush2.bf16.msra.mxu0 0
    %160 = vmatprep.subr.bf16.mxu0 0
    %161 = vmatpush2.bf16.msra.mxu0 0
    %162 = vmatprep.subr.bf16.mxu0 0
    %163 = vmatpush2.bf16.msra.mxu0 0
    %164 = vmatprep.subr.bf16.mxu0 0
    %165 = vmatpush2.bf16.msra.mxu0 0
    %166 = vmatprep.subr.bf16.mxu0 0
    %167 = vmatpush2.bf16.msra.mxu0 0
    %168 = vmatprep.mubr.bf16.mxu0 0
    %169 = vmatmul.mubr.bf16.gmra.mxu0 %v134
    %v170 = vpop.f32.mrf.mxu0
    %v171 = vadd.f32 0.0, %v170
    %v172 = vpop.f32.mrf.mxu0
    %v173 = vadd.f32 0.0, %v172
    %v174 = vpop.f32.mrf.mxu0
    %v175 = vadd.f32 0.0, %v174
    %v176 = vpop.f32.mrf.mxu0
    %v177 = vadd.f32 0.0, %v176
    %178 = vdwg.mxu0
    %179 = vmatprep.subr.bf16.mxu0 0
    %180 = vmatpush1.bf16.msra.mxu0 0
    %181 = vmatprep.subr.bf16.mxu0 0
    %182 = vmatpush1.bf16.msra.mxu0 0
    %183 = vmatprep.subr.bf16.mxu0 0
    %184 = vmatpush1.bf16.msra.mxu0 0
    %185 = vmatprep.subr.bf16.mxu0 0
    %186 = vmatpush1.bf16.msra.mxu0 0
    %187 = vmatprep.subr.bf16.mxu0 0
    %188 = vmatpush1.bf16.msra.mxu0 0
    %189 = vmatprep.subr.bf16.mxu0 0
    %190 = vmatpush1.bf16.msra.mxu0 0
    %191 = vmatprep.subr.bf16.mxu0 0
    %192 = vmatpush1.bf16.msra.mxu0 %v125
    %193 = vmatprep.subr.bf16.mxu0 0
    %194 = vmatpush1.bf16.msra.mxu0 %v122
    %195 = vmatprep.subr.bf16.mxu0 0
    %196 = vmatpush2.bf16.msra.mxu0 0
    %197 = vmatprep.subr.bf16.mxu0 0
    %198 = vmatpush2.bf16.msra.mxu0 0
    %199 = vmatprep.subr.bf16.mxu0 0
    %200 = vmatpush2.bf16.msra.mxu0 0
    %201 = vmatprep.subr.bf16.mxu0 0
    %202 = vmatpush2.bf16.msra.mxu0 0
    %203 = vmatprep.subr.bf16.mxu0 0
    %204 = vmatpush2.bf16.msra.mxu0 0
    %205 = vmatprep.subr.bf16.mxu0 0
    %206 = vmatpush2.bf16.msra.mxu0 0
    %207 = vmatprep.subr.bf16.mxu0 0
    %208 = vmatpush2.bf16.msra.mxu0 0
    %209 = vmatprep.subr.bf16.mxu0 0
    %210 = vmatpush2.bf16.msra.mxu0 0
    %211 = vmatprep.mubr.bf16.mxu0 0
    %212 = vmatmul.mubr.bf16.gmra.mxu0 %v134
    %v213 = vpop.f32.mrf.mxu0
    %v214 = vadd.f32 0.0, %v213
    %v215 = vpop.f32.mrf.mxu0
    %v216 = vpop.f32.mrf.mxu0
    %v217 = vadd.f32 0.0, %v216
    %v218 = vpop.f32.mrf.mxu0
    %219 = vdwg.mxu0
    %v221 = vsel %vm132, %v78, 0
    %223 = vmatprep.subr.bf16.mxu0 0
    %224 = vmatpush1.bf16.msra.mxu0 0
    %225 = vmatprep.subr.bf16.mxu0 0
    %226 = vmatpush1.bf16.msra.mxu0 0
    %227 = vmatprep.subr.bf16.mxu0 0
    %228 = vmatpush1.bf16.msra.mxu0 0
    %229 = vmatprep.subr.bf16.mxu0 0
    %230 = vmatpush1.bf16.msra.mxu0 0
    %231 = vmatprep.subr.bf16.mxu0 0
    %232 = vmatpush1.bf16.msra.mxu0 0
    %233 = vmatprep.subr.bf16.mxu0 0
    %234 = vmatpush1.bf16.msra.mxu0 0
    %235 = vmatprep.subr.bf16.mxu0 %v124
    %236 = vmatpush1.bf16.msra.mxu0 %v123
    %237 = vmatprep.subr.bf16.mxu0 %v121
    %238 = vmatpush1.bf16.msra.mxu0 %v120
    %239 = vmatprep.subr.bf16.mxu0 0
    %240 = vmatpush2.bf16.msra.mxu0 0
    %241 = vmatprep.subr.bf16.mxu0 0
    %242 = vmatpush2.bf16.msra.mxu0 0
    %243 = vmatprep.subr.bf16.mxu0 0
    %244 = vmatpush2.bf16.msra.mxu0 0
    %245 = vmatprep.subr.bf16.mxu0 0
    %246 = vmatpush2.bf16.msra.mxu0 0
    %247 = vmatprep.subr.bf16.mxu0 0
    %248 = vmatpush2.bf16.msra.mxu0 0
    %249 = vmatprep.subr.bf16.mxu0 0
    %250 = vmatpush2.bf16.msra.mxu0 0
    %251 = vmatprep.subr.bf16.mxu0 0
    %252 = vmatpush2.bf16.msra.mxu0 0
    %253 = vmatprep.subr.bf16.mxu0 0
    %254 = vmatpush2.bf16.msra.mxu0 0
    %255 = vmatprep.mubr.bf16.mxu0 0
    %256 = vmatmul.mubr.bf16.gmra.mxu0 %v221
    %v257 = vpop.f32.mrf.mxu0
    %v258 = vadd.f32 %v171, %v257
    %v259 = vpop.f32.mrf.mxu0
    %v260 = vadd.f32 %v173, %v259
    %v261 = vpop.f32.mrf.mxu0
    %v262 = vadd.f32 %v175, %v261
    %v263 = vpop.f32.mrf.mxu0
    %v264 = vadd.f32 %v177, %v263
    %265 = vdwg.mxu0
    %266 = vmatprep.subr.bf16.mxu0 0
    %267 = vmatpush1.bf16.msra.mxu0 0
    %268 = vmatprep.subr.bf16.mxu0 0
    %269 = vmatpush1.bf16.msra.mxu0 0
    %270 = vmatprep.subr.bf16.mxu0 0
    %271 = vmatpush1.bf16.msra.mxu0 0
    %272 = vmatprep.subr.bf16.mxu0 0
    %273 = vmatpush1.bf16.msra.mxu0 0
    %274 = vmatprep.subr.bf16.mxu0 0
    %275 = vmatpush1.bf16.msra.mxu0 0
    %276 = vmatprep.subr.bf16.mxu0 0
    %277 = vmatpush1.bf16.msra.mxu0 0
    %278 = vmatprep.subr.bf16.mxu0 0
    %279 = vmatpush1.bf16.msra.mxu0 %v125
    %280 = vmatprep.subr.bf16.mxu0 0
    %281 = vmatpush1.bf16.msra.mxu0 %v122
    %282 = vmatprep.subr.bf16.mxu0 0
    %283 = vmatpush2.bf16.msra.mxu0 0
    %284 = vmatprep.subr.bf16.mxu0 0
    %285 = vmatpush2.bf16.msra.mxu0 0
    %286 = vmatprep.subr.bf16.mxu0 0
    %287 = vmatpush2.bf16.msra.mxu0 0
    %288 = vmatprep.subr.bf16.mxu0 0
    %289 = vmatpush2.bf16.msra.mxu0 0
    %290 = vmatprep.subr.bf16.mxu0 0
    %291 = vmatpush2.bf16.msra.mxu0 0
    %292 = vmatprep.subr.bf16.mxu0 0
    %293 = vmatpush2.bf16.msra.mxu0 0
    %294 = vmatprep.subr.bf16.mxu0 0
    %295 = vmatpush2.bf16.msra.mxu0 0
    %296 = vmatprep.subr.bf16.mxu0 0
    %297 = vmatpush2.bf16.msra.mxu0 0
    %298 = vmatprep.mubr.bf16.mxu0 0
    %299 = vmatmul.mubr.bf16.gmra.mxu0 %v221
    %v300 = vpop.f32.mrf.mxu0
    %v301 = vadd.f32 %v214, %v300
    %v302 = vpop.f32.mrf.mxu0
    %v303 = vpop.f32.mrf.mxu0
    %v304 = vadd.f32 %v217, %v303
    %v305 = vpop.f32.mrf.mxu0
    %306 = vdwg.mxu0
    %v315 = vunpack.c.l.b16 %v92
    %v316 = vunpack.c.h.b16 %v92
    %v317 = vunpack.c.l.b16 %v93
    %v318 = vunpack.c.l.b16 %v94
    %v319 = vunpack.c.h.b16 %v94
    %v320 = vunpack.c.l.b16 %v95
    %v321 = vunpack.c.l.b16 %v96
    %v322 = vunpack.c.h.b16 %v96
    %v323 = vunpack.c.l.b16 %v97
    %v324 = vunpack.c.l.b16 %v98
    %v325 = vunpack.c.h.b16 %v98
    %v326 = vunpack.c.l.b16 %v99
    %v327 = vpack.c.b16 %v318, %v315
    %v328 = vpack.c.b16 %v319, %v316
    %v329 = vpack.c.b16 %v320, %v317
    %v330 = vpack.c.b16 %v324, %v321
    %v331 = vpack.c.b16 %v325, %v322
    %v332 = vpack.c.b16 %v326, %v323
    %339 = vmatprep.subr.bf16.mxu0 0
    %340 = vmatpush1.bf16.msra.mxu0 0
    %341 = vmatprep.subr.bf16.mxu0 0
    %342 = vmatpush1.bf16.msra.mxu0 0
    %343 = vmatprep.subr.bf16.mxu0 0
    %344 = vmatpush1.bf16.msra.mxu0 0
    %345 = vmatprep.subr.bf16.mxu0 0
    %346 = vmatpush1.bf16.msra.mxu0 0
    %347 = vmatprep.subr.bf16.mxu0 0
    %348 = vmatpush1.bf16.msra.mxu0 0
    %349 = vmatprep.subr.bf16.mxu0 0
    %350 = vmatpush1.bf16.msra.mxu0 0
    %351 = vmatprep.subr.bf16.mxu0 %v331
    %352 = vmatpush1.bf16.msra.mxu0 %v330
    %353 = vmatprep.subr.bf16.mxu0 %v328
    %354 = vmatpush1.bf16.msra.mxu0 %v327
    %355 = vmatprep.subr.bf16.mxu0 0
    %356 = vmatpush2.bf16.msra.mxu0 0
    %357 = vmatprep.subr.bf16.mxu0 0
    %358 = vmatpush2.bf16.msra.mxu0 0
    %359 = vmatprep.subr.bf16.mxu0 0
    %360 = vmatpush2.bf16.msra.mxu0 0
    %361 = vmatprep.subr.bf16.mxu0 0
    %362 = vmatpush2.bf16.msra.mxu0 0
    %363 = vmatprep.subr.bf16.mxu0 0
    %364 = vmatpush2.bf16.msra.mxu0 0
    %365 = vmatprep.subr.bf16.mxu0 0
    %366 = vmatpush2.bf16.msra.mxu0 0
    %367 = vmatprep.subr.bf16.mxu0 0
    %368 = vmatpush2.bf16.msra.mxu0 0
    %369 = vmatprep.subr.bf16.mxu0 0
    %370 = vmatpush2.bf16.msra.mxu0 0
    %371 = vmatprep.mubr.bf16.mxu0 0
    %372 = vmatmul.mubr.bf16.gmra.mxu0 %v221
    %v373 = vpop.f32.mrf.mxu0
    %v374 = vadd.f32 0.0, %v373
    %v375 = vpop.f32.mrf.mxu0
    %v376 = vadd.f32 0.0, %v375
    %v377 = vpop.f32.mrf.mxu0
    %v378 = vadd.f32 0.0, %v377
    %v379 = vpop.f32.mrf.mxu0
    %v380 = vadd.f32 0.0, %v379
    %381 = vdwg.mxu0
    %382 = vmatprep.subr.bf16.mxu0 0
    %383 = vmatpush1.bf16.msra.mxu0 0
    %384 = vmatprep.subr.bf16.mxu0 0
    %385 = vmatpush1.bf16.msra.mxu0 0
    %386 = vmatprep.subr.bf16.mxu0 0
    %387 = vmatpush1.bf16.msra.mxu0 0
    %388 = vmatprep.subr.bf16.mxu0 0
    %389 = vmatpush1.bf16.msra.mxu0 0
    %390 = vmatprep.subr.bf16.mxu0 0
    %391 = vmatpush1.bf16.msra.mxu0 0
    %392 = vmatprep.subr.bf16.mxu0 0
    %393 = vmatpush1.bf16.msra.mxu0 0
    %394 = vmatprep.subr.bf16.mxu0 0
    %395 = vmatpush1.bf16.msra.mxu0 %v332
    %396 = vmatprep.subr.bf16.mxu0 0
    %397 = vmatpush1.bf16.msra.mxu0 %v329
    %398 = vmatprep.subr.bf16.mxu0 0
    %399 = vmatpush2.bf16.msra.mxu0 0
    %400 = vmatprep.subr.bf16.mxu0 0
    %401 = vmatpush2.bf16.msra.mxu0 0
    %402 = vmatprep.subr.bf16.mxu0 0
    %403 = vmatpush2.bf16.msra.mxu0 0
    %404 = vmatprep.subr.bf16.mxu0 0
    %405 = vmatpush2.bf16.msra.mxu0 0
    %406 = vmatprep.subr.bf16.mxu0 0
    %407 = vmatpush2.bf16.msra.mxu0 0
    %408 = vmatprep.subr.bf16.mxu0 0
    %409 = vmatpush2.bf16.msra.mxu0 0
    %410 = vmatprep.subr.bf16.mxu0 0
    %411 = vmatpush2.bf16.msra.mxu0 0
    %412 = vmatprep.subr.bf16.mxu0 0
    %413 = vmatpush2.bf16.msra.mxu0 0
    %414 = vmatprep.mubr.bf16.mxu0 0
    %415 = vmatmul.mubr.bf16.gmra.mxu0 %v221
    %v416 = vpop.f32.mrf.mxu0
    %v417 = vadd.f32 0.0, %v416
    %v418 = vpop.f32.mrf.mxu0
    %v419 = vpop.f32.mrf.mxu0
    %v420 = vadd.f32 0.0, %v419
    %v421 = vpop.f32.mrf.mxu0
    %422 = vdwg.mxu0
    %v423 = vadd.f32 %v258, %v374
    %v424 = vadd.f32 %v260, %v376
    %v425 = vadd.f32 %v301, %v417
    %v426 = vadd.f32 %v262, %v378
    %v427 = vadd.f32 %v264, %v380
    %v428 = vadd.f32 %v304, %v420
    %v429 = vld [vmem:[%s4] sm:$0x7]
    %v431 = vlaneseq
    %v432 = vshrl.u32 %v431, 7
    %v433 = vsub.s32 0, %v432
    %v434 = vrot.slane %v429, %v433
    %v435 = vlaneseq
    %v436 = vshrl.u32 %v435, 7
    %v437 = vsub.s32 1, %v436
    %v438 = vrot.slane %v429, %v437
    %v439 = vlaneseq
    %v440 = vshrl.u32 %v439, 7
    %v441 = vsub.s32 2, %v440
    %v442 = vrot.slane %v429, %v441
    %v446 = vadd.f32 %v423, %v434
    %v447 = vadd.f32 %v424, %v438
    %v448 = vadd.f32 %v425, %v442
    %v449 = vadd.f32 %v426, %v434
    %v450 = vadd.f32 %v427, %v438
    %v451 = vadd.f32 %v428, %v442
    %v452 = vld [vmem:[%s1] sm:$0xff]
    %v453 = vld [vmem:[%s1 + $0x8] sm:$0xff]
    %v454 = vld [vmem:[%s1 + $0x10] sm:$0xff]
    %v455 = vld [vmem:[%s1 + $0x18] sm:$0xff]
    %v456 = vld [vmem:[%s1 + $0x20] sm:$0xff]
    %v457 = vld [vmem:[%s1 + $0x28] sm:$0xff]
    %v458 = vld [vmem:[%s1 + $0x30] sm:$0xff]
    %v459 = vld [vmem:[%s1 + $0x38] sm:$0xff]
    %v460 = vpack.c.bf16 %v454, %v452
    %v461 = vpack.c.bf16 %v455, %v453
    %v462 = vpack.c.bf16 %v458, %v456
    %v463 = vpack.c.bf16 %v459, %v457
    %v464 = vunpack.c.l.bf16 %v460
    %v465 = vunpack.c.l.bf16 %v461
    %v466 = vunpack.c.h.bf16 %v460
    %v467 = vunpack.c.h.bf16 %v461
    %v468 = vunpack.c.l.bf16 %v462
    %v469 = vunpack.c.l.bf16 %v463
    %v470 = vunpack.c.h.bf16 %v462
    %v471 = vunpack.c.h.bf16 %v463
    %v472 = vsub.f32 %v452, %v464
    %v473 = vsub.f32 %v453, %v465
    %v474 = vsub.f32 %v454, %v466
    %v475 = vsub.f32 %v455, %v467
    %v476 = vsub.f32 %v456, %v468
    %v477 = vsub.f32 %v457, %v469
    %v478 = vsub.f32 %v458, %v470
    %v479 = vsub.f32 %v459, %v471
    %v480 = vpack.c.bf16 %v474, %v472
    %v481 = vpack.c.bf16 %v475, %v473
    %v482 = vpack.c.bf16 %v478, %v476
    %v483 = vpack.c.bf16 %v479, %v477
    %v484 = vld [vmem:[%s5] sm:$0xff]
    %v485 = vld [vmem:[%s5 + $0x8] sm:$0xf]
    %v486 = vld [vmem:[%s5 + $0xc] sm:$0xff]
    %v487 = vld [vmem:[%s5 + $0x14] sm:$0xf]
    %v488 = vld [vmem:[%s5 + $0x18] sm:$0xff]
    %v489 = vld [vmem:[%s5 + $0x20] sm:$0xf]
    %v490 = vld [vmem:[%s5 + $0x24] sm:$0xff]
    %v491 = vld [vmem:[%s5 + $0x2c] sm:$0xf]
    %v492 = vld [vmem:[%s5 + $0x30] sm:$0xff]
    %v493 = vld [vmem:[%s5 + $0x38] sm:$0xf]
    %v494 = vld [vmem:[%s5 + $0x3c] sm:$0xff]
    %v495 = vld [vmem:[%s5 + $0x44] sm:$0xf]
    %v496 = vld [vmem:[%s5 + $0x48] sm:$0xff]
    %v497 = vld [vmem:[%s5 + $0x50] sm:$0xf]
    %v498 = vld [vmem:[%s5 + $0x54] sm:$0xff]
    %v499 = vld [vmem:[%s5 + $0x5c] sm:$0xf]
    %v500 = vld [vmem:[%s5 + $0x60] sm:$0xff]
    %v501 = vld [vmem:[%s5 + $0x68] sm:$0xf]
    %v502 = vld [vmem:[%s5 + $0x6c] sm:$0xff]
    %v503 = vld [vmem:[%s5 + $0x74] sm:$0xf]
    %v504 = vld [vmem:[%s5 + $0x78] sm:$0xff]
    %v505 = vld [vmem:[%s5 + $0x80] sm:$0xf]
    %v506 = vld [vmem:[%s5 + $0x84] sm:$0xff]
    %v507 = vld [vmem:[%s5 + $0x8c] sm:$0xf]
    %v508 = vld [vmem:[%s5 + $0x90] sm:$0xff]
    %v509 = vld [vmem:[%s5 + $0x98] sm:$0xf]
    %v510 = vld [vmem:[%s5 + $0x9c] sm:$0xff]
    %v511 = vld [vmem:[%s5 + $0xa4] sm:$0xf]
    %v512 = vld [vmem:[%s5 + $0xa8] sm:$0xff]
    %v513 = vld [vmem:[%s5 + $0xb0] sm:$0xf]
    %v514 = vld [vmem:[%s5 + $0xb4] sm:$0xff]
    %v515 = vld [vmem:[%s5 + $0xbc] sm:$0xf]
    %v516 = vld [vmem:[%s5 + $0xc0] sm:$0xff]
    %v517 = vld [vmem:[%s5 + $0xc8] sm:$0xf]
    %v518 = vld [vmem:[%s5 + $0xcc] sm:$0xff]
    %v519 = vld [vmem:[%s5 + $0xd4] sm:$0xf]
    %v520 = vld [vmem:[%s5 + $0xd8] sm:$0xff]
    %v521 = vld [vmem:[%s5 + $0xe0] sm:$0xf]
    %v522 = vld [vmem:[%s5 + $0xe4] sm:$0xff]
    %v523 = vld [vmem:[%s5 + $0xec] sm:$0xf]
    %v524 = vld [vmem:[%s5 + $0xf0] sm:$0xff]
    %v525 = vld [vmem:[%s5 + $0xf8] sm:$0xf]
    %v526 = vld [vmem:[%s5 + $0xfc] sm:$0xff]
    %v527 = vld [vmem:[%s5 + $0x104] sm:$0xf]
    %v528 = vld [vmem:[%s5 + $0x108] sm:$0xff]
    %v529 = vld [vmem:[%s5 + $0x110] sm:$0xf]
    %v530 = vld [vmem:[%s5 + $0x114] sm:$0xff]
    %v531 = vld [vmem:[%s5 + $0x11c] sm:$0xf]
    %v532 = vld [vmem:[%s5 + $0x120] sm:$0xff]
    %v533 = vld [vmem:[%s5 + $0x128] sm:$0xf]
    %v534 = vld [vmem:[%s5 + $0x12c] sm:$0xff]
    %v535 = vld [vmem:[%s5 + $0x134] sm:$0xf]
    %v536 = vld [vmem:[%s5 + $0x138] sm:$0xff]
    %v537 = vld [vmem:[%s5 + $0x140] sm:$0xf]
    %v538 = vld [vmem:[%s5 + $0x144] sm:$0xff]
    %v539 = vld [vmem:[%s5 + $0x14c] sm:$0xf]
    %v540 = vld [vmem:[%s5 + $0x150] sm:$0xff]
    %v541 = vld [vmem:[%s5 + $0x158] sm:$0xf]
    %v542 = vld [vmem:[%s5 + $0x15c] sm:$0xff]
    %v543 = vld [vmem:[%s5 + $0x164] sm:$0xf]
    %v544 = vld [vmem:[%s5 + $0x168] sm:$0xff]
    %v545 = vld [vmem:[%s5 + $0x170] sm:$0xf]
    %v546 = vld [vmem:[%s5 + $0x174] sm:$0xff]
    %v547 = vld [vmem:[%s5 + $0x17c] sm:$0xf]
    %v548 = vld [vmem:[#allocation6] sm:$0xff]
    %v549 = vld [vmem:[#allocation6 + $0x8] sm:$0xf]
    %v550 = vld [vmem:[#allocation6 + $0xc] sm:$0xff]
    %v551 = vld [vmem:[#allocation6 + $0x14] sm:$0xf]
    %v552 = vld [vmem:[#allocation6 + $0x18] sm:$0xff]
    %v553 = vld [vmem:[#allocation6 + $0x20] sm:$0xf]
    %v554 = vld [vmem:[#allocation6 + $0x24] sm:$0xff]
    %v555 = vld [vmem:[#allocation6 + $0x2c] sm:$0xf]
    %v556 = vld [vmem:[#allocation6 + $0x30] sm:$0xff]
    %v557 = vld [vmem:[#allocation6 + $0x38] sm:$0xf]
    %v558 = vld [vmem:[#allocation6 + $0x3c] sm:$0xff]
    %v559 = vld [vmem:[#allocation6 + $0x44] sm:$0xf]
    %v560 = vld [vmem:[#allocation6 + $0x48] sm:$0xff]
    %v561 = vld [vmem:[#allocation6 + $0x50] sm:$0xf]
    %v562 = vld [vmem:[#allocation6 + $0x54] sm:$0xff]
    %v563 = vld [vmem:[#allocation6 + $0x5c] sm:$0xf]
    %v564 = vld [vmem:[#allocation6 + $0x60] sm:$0xff]
    %v565 = vld [vmem:[#allocation6 + $0x68] sm:$0xf]
    %v566 = vld [vmem:[#allocation6 + $0x6c] sm:$0xff]
    %v567 = vld [vmem:[#allocation6 + $0x74] sm:$0xf]
    %v568 = vld [vmem:[#allocation6 + $0x78] sm:$0xff]
    %v569 = vld [vmem:[#allocation6 + $0x80] sm:$0xf]
    %v570 = vld [vmem:[#allocation6 + $0x84] sm:$0xff]
    %v571 = vld [vmem:[#allocation6 + $0x8c] sm:$0xf]
    %v572 = vld [vmem:[#allocation6 + $0x90] sm:$0xff]
    %v573 = vld [vmem:[#allocation6 + $0x98] sm:$0xf]
    %v574 = vld [vmem:[#allocation6 + $0x9c] sm:$0xff]
    %v575 = vld [vmem:[#allocation6 + $0xa4] sm:$0xf]
    %v576 = vld [vmem:[#allocation6 + $0xa8] sm:$0xff]
    %v577 = vld [vmem:[#allocation6 + $0xb0] sm:$0xf]
    %v578 = vld [vmem:[#allocation6 + $0xb4] sm:$0xff]
    %v579 = vld [vmem:[#allocation6 + $0xbc] sm:$0xf]
    %v580 = vld [vmem:[#allocation6 + $0xc0] sm:$0xff]
    %v581 = vld [vmem:[#allocation6 + $0xc8] sm:$0xf]
    %v582 = vld [vmem:[#allocation6 + $0xcc] sm:$0xff]
    %v583 = vld [vmem:[#allocation6 + $0xd4] sm:$0xf]
    %v584 = vld [vmem:[#allocation6 + $0xd8] sm:$0xff]
    %v585 = vld [vmem:[#allocation6 + $0xe0] sm:$0xf]
    %v586 = vld [vmem:[#allocation6 + $0xe4] sm:$0xff]
    %v587 = vld [vmem:[#allocation6 + $0xec] sm:$0xf]
    %v588 = vld [vmem:[#allocation6 + $0xf0] sm:$0xff]
    %v589 = vld [vmem:[#allocation6 + $0xf8] sm:$0xf]
    %v590 = vld [vmem:[#allocation6 + $0xfc] sm:$0xff]
    %v591 = vld [vmem:[#allocation6 + $0x104] sm:$0xf]
    %v592 = vld [vmem:[#allocation6 + $0x108] sm:$0xff]
    %v593 = vld [vmem:[#allocation6 + $0x110] sm:$0xf]
    %v594 = vld [vmem:[#allocation6 + $0x114] sm:$0xff]
    %v595 = vld [vmem:[#allocation6 + $0x11c] sm:$0xf]
    %v596 = vld [vmem:[#allocation6 + $0x120] sm:$0xff]
    %v597 = vld [vmem:[#allocation6 + $0x128] sm:$0xf]
    %v598 = vld [vmem:[#allocation6 + $0x12c] sm:$0xff]
    %v599 = vld [vmem:[#allocation6 + $0x134] sm:$0xf]
    %v600 = vld [vmem:[#allocation6 + $0x138] sm:$0xff]
    %v601 = vld [vmem:[#allocation6 + $0x140] sm:$0xf]
    %v602 = vld [vmem:[#allocation6 + $0x144] sm:$0xff]
    %v603 = vld [vmem:[#allocation6 + $0x14c] sm:$0xf]
    %v604 = vld [vmem:[#allocation6 + $0x150] sm:$0xff]
    %v605 = vld [vmem:[#allocation6 + $0x158] sm:$0xf]
    %v606 = vld [vmem:[#allocation6 + $0x15c] sm:$0xff]
    %v607 = vld [vmem:[#allocation6 + $0x164] sm:$0xf]
    %v608 = vld [vmem:[#allocation6 + $0x168] sm:$0xff]
    %v609 = vld [vmem:[#allocation6 + $0x170] sm:$0xf]
    %v610 = vld [vmem:[#allocation6 + $0x174] sm:$0xff]
    %v611 = vld [vmem:[#allocation6 + $0x17c] sm:$0xf]
    %v676 = vunpack.c.l.b16 %v484
    %v677 = vunpack.c.h.b16 %v484
    %v678 = vunpack.c.l.b16 %v485
    %v679 = vunpack.c.l.b16 %v486
    %v680 = vunpack.c.h.b16 %v486
    %v681 = vunpack.c.l.b16 %v487
    %v682 = vunpack.c.l.b16 %v488
    %v683 = vunpack.c.h.b16 %v488
    %v684 = vunpack.c.l.b16 %v489
    %v685 = vunpack.c.l.b16 %v490
    %v686 = vunpack.c.h.b16 %v490
    %v687 = vunpack.c.l.b16 %v491
    %v688 = vunpack.c.l.b16 %v492
    %v689 = vunpack.c.h.b16 %v492
    %v690 = vunpack.c.l.b16 %v493
    %v691 = vunpack.c.l.b16 %v494
    %v692 = vunpack.c.h.b16 %v494
    %v693 = vunpack.c.l.b16 %v495
    %v694 = vunpack.c.l.b16 %v496
    %v695 = vunpack.c.h.b16 %v496
    %v696 = vunpack.c.l.b16 %v497
    %v697 = vunpack.c.l.b16 %v498
    %v698 = vunpack.c.h.b16 %v498
    %v699 = vunpack.c.l.b16 %v499
    %v700 = vunpack.c.l.b16 %v500
    %v701 = vunpack.c.h.b16 %v500
    %v702 = vunpack.c.l.b16 %v501
    %v703 = vunpack.c.l.b16 %v502
    %v704 = vunpack.c.h.b16 %v502
    %v705 = vunpack.c.l.b16 %v503
    %v706 = vunpack.c.l.b16 %v504
    %v707 = vunpack.c.h.b16 %v504
    %v708 = vunpack.c.l.b16 %v505
    %v709 = vunpack.c.l.b16 %v506
    %v710 = vunpack.c.h.b16 %v506
    %v711 = vunpack.c.l.b16 %v507
    %v712 = vunpack.c.l.b16 %v508
    %v713 = vunpack.c.h.b16 %v508
    %v714 = vunpack.c.l.b16 %v509
    %v715 = vunpack.c.l.b16 %v510
    %v716 = vunpack.c.h.b16 %v510
    %v717 = vunpack.c.l.b16 %v511
    %v718 = vunpack.c.l.b16 %v512
    %v719 = vunpack.c.h.b16 %v512
    %v720 = vunpack.c.l.b16 %v513
    %v721 = vunpack.c.l.b16 %v514
    %v722 = vunpack.c.h.b16 %v514
    %v723 = vunpack.c.l.b16 %v515
    %v724 = vunpack.c.l.b16 %v516
    %v725 = vunpack.c.h.b16 %v516
    %v726 = vunpack.c.l.b16 %v517
    %v727 = vunpack.c.l.b16 %v518
    %v728 = vunpack.c.h.b16 %v518
    %v729 = vunpack.c.l.b16 %v519
    %v730 = vunpack.c.l.b16 %v520
    %v731 = vunpack.c.h.b16 %v520
    %v732 = vunpack.c.l.b16 %v521
    %v733 = vunpack.c.l.b16 %v522
    %v734 = vunpack.c.h.b16 %v522
    %v735 = vunpack.c.l.b16 %v523
    %v736 = vunpack.c.l.b16 %v524
    %v737 = vunpack.c.h.b16 %v524
    %v738 = vunpack.c.l.b16 %v525
    %v739 = vunpack.c.l.b16 %v526
    %v740 = vunpack.c.h.b16 %v526
    %v741 = vunpack.c.l.b16 %v527
    %v742 = vunpack.c.l.b16 %v528
    %v743 = vunpack.c.h.b16 %v528
    %v744 = vunpack.c.l.b16 %v529
    %v745 = vunpack.c.l.b16 %v530
    %v746 = vunpack.c.h.b16 %v530
    %v747 = vunpack.c.l.b16 %v531
    %v748 = vunpack.c.l.b16 %v532
    %v749 = vunpack.c.h.b16 %v532
    %v750 = vunpack.c.l.b16 %v533
    %v751 = vunpack.c.l.b16 %v534
    %v752 = vunpack.c.h.b16 %v534
    %v753 = vunpack.c.l.b16 %v535
    %v754 = vunpack.c.l.b16 %v536
    %v755 = vunpack.c.h.b16 %v536
    %v756 = vunpack.c.l.b16 %v537
    %v757 = vunpack.c.l.b16 %v538
    %v758 = vunpack.c.h.b16 %v538
    %v759 = vunpack.c.l.b16 %v539
    %v760 = vunpack.c.l.b16 %v540
    %v761 = vunpack.c.h.b16 %v540
    %v762 = vunpack.c.l.b16 %v541
    %v763 = vunpack.c.l.b16 %v542
    %v764 = vunpack.c.h.b16 %v542
    %v765 = vunpack.c.l.b16 %v543
    %v766 = vunpack.c.l.b16 %v544
    %v767 = vunpack.c.h.b16 %v544
    %v768 = vunpack.c.l.b16 %v545
    %v769 = vunpack.c.l.b16 %v546
    %v770 = vunpack.c.h.b16 %v546
    %v771 = vunpack.c.l.b16 %v547
    %v772 = vpack.c.b16 %v679, %v676
    %v773 = vpack.c.b16 %v680, %v677
    %v774 = vpack.c.b16 %v681, %v678
    %v775 = vpack.c.b16 %v685, %v682
    %v776 = vpack.c.b16 %v686, %v683
    %v777 = vpack.c.b16 %v687, %v684
    %v778 = vpack.c.b16 %v691, %v688
    %v779 = vpack.c.b16 %v692, %v689
    %v780 = vpack.c.b16 %v693, %v690
    %v781 = vpack.c.b16 %v697, %v694
    %v782 = vpack.c.b16 %v698, %v695
    %v783 = vpack.c.b16 %v699, %v696
    %v784 = vpack.c.b16 %v703, %v700
    %v785 = vpack.c.b16 %v704, %v701
    %v786 = vpack.c.b16 %v705, %v702
    %v787 = vpack.c.b16 %v709, %v706
    %v788 = vpack.c.b16 %v710, %v707
    %v789 = vpack.c.b16 %v711, %v708
    %v790 = vpack.c.b16 %v715, %v712
    %v791 = vpack.c.b16 %v716, %v713
    %v792 = vpack.c.b16 %v717, %v714
    %v793 = vpack.c.b16 %v721, %v718
    %v794 = vpack.c.b16 %v722, %v719
    %v795 = vpack.c.b16 %v723, %v720
    %v796 = vpack.c.b16 %v727, %v724
    %v797 = vpack.c.b16 %v728, %v725
    %v798 = vpack.c.b16 %v729, %v726
    %v799 = vpack.c.b16 %v733, %v730
    %v800 = vpack.c.b16 %v734, %v731
    %v801 = vpack.c.b16 %v735, %v732
    %v802 = vpack.c.b16 %v739, %v736
    %v803 = vpack.c.b16 %v740, %v737
    %v804 = vpack.c.b16 %v741, %v738
    %v805 = vpack.c.b16 %v745, %v742
    %v806 = vpack.c.b16 %v746, %v743
    %v807 = vpack.c.b16 %v747, %v744
    %v808 = vpack.c.b16 %v751, %v748
    %v809 = vpack.c.b16 %v752, %v749
    %v810 = vpack.c.b16 %v753, %v750
    %v811 = vpack.c.b16 %v757, %v754
    %v812 = vpack.c.b16 %v758, %v755
    %v813 = vpack.c.b16 %v759, %v756
    %v814 = vpack.c.b16 %v763, %v760
    %v815 = vpack.c.b16 %v764, %v761
    %v816 = vpack.c.b16 %v765, %v762
    %v817 = vpack.c.b16 %v769, %v766
    %v818 = vpack.c.b16 %v770, %v767
    %v819 = vpack.c.b16 %v771, %v768
    %868 = vmatprep.subr.bf16.mxu0 %v794
    %869 = vmatpush1.bf16.msra.mxu0 %v793
    %870 = vmatprep.subr.bf16.mxu0 %v791
    %871 = vmatpush1.bf16.msra.mxu0 %v790
    %872 = vmatprep.subr.bf16.mxu0 %v788
    %873 = vmatpush1.bf16.msra.mxu0 %v787
    %874 = vmatprep.subr.bf16.mxu0 %v785
    %875 = vmatpush1.bf16.msra.mxu0 %v784
    %876 = vmatprep.subr.bf16.mxu0 %v782
    %877 = vmatpush1.bf16.msra.mxu0 %v781
    %878 = vmatprep.subr.bf16.mxu0 %v779
    %879 = vmatpush1.bf16.msra.mxu0 %v778
    %880 = vmatprep.subr.bf16.mxu0 %v776
    %881 = vmatpush1.bf16.msra.mxu0 %v775
    %882 = vmatprep.subr.bf16.mxu0 %v773
    %883 = vmatpush1.bf16.msra.mxu0 %v772
    %884 = vmatprep.subr.bf16.mxu0 %v818
    %885 = vmatpush2.bf16.msra.mxu0 %v817
    %886 = vmatprep.subr.bf16.mxu0 %v815
    %887 = vmatpush2.bf16.msra.mxu0 %v814
    %888 = vmatprep.subr.bf16.mxu0 %v812
    %889 = vmatpush2.bf16.msra.mxu0 %v811
    %890 = vmatprep.subr.bf16.mxu0 %v809
    %891 = vmatpush2.bf16.msra.mxu0 %v808
    %892 = vmatprep.subr.bf16.mxu0 %v806
    %893 = vmatpush2.bf16.msra.mxu0 %v805
    %894 = vmatprep.subr.bf16.mxu0 %v803
    %895 = vmatpush2.bf16.msra.mxu0 %v802
    %896 = vmatprep.subr.bf16.mxu0 %v800
    %897 = vmatpush2.bf16.msra.mxu0 %v799
    %898 = vmatprep.subr.bf16.mxu0 %v797
    %899 = vmatpush2.bf16.msra.mxu0 %v796
    %900 = vmatprep.mubr.bf16.mxu0 %v481
    %901 = vmatmul.mubr.bf16.gmra.mxu0 %v480
    %v902 = vpop.f32.mrf.mxu0
    %v903 = vpop.f32.mrf.mxu0
    %v904 = vpop.f32.mrf.mxu0
    %v905 = vpop.f32.mrf.mxu0
    %906 = vmatprep.mubr.bf16.mxu0 %v483
    %907 = vmatmul.mubr.bf16.gmra.mxu0 %v482
    %v908 = vpop.f32.mrf.mxu0
    %v909 = vadd.f32 0.0, %v908
    %v910 = vpop.f32.mrf.mxu0
    %v911 = vadd.f32 0.0, %v910
    %v912 = vpop.f32.mrf.mxu0
    %v913 = vadd.f32 0.0, %v912
    %v914 = vpop.f32.mrf.mxu0
    %v915 = vadd.f32 0.0, %v914
    %916 = vdwg.mxu0
    %917 = vmatprep.subr.bf16.mxu0 0
    %918 = vmatpush1.bf16.msra.mxu0 %v795
    %919 = vmatprep.subr.bf16.mxu0 0
    %920 = vmatpush1.bf16.msra.mxu0 %v792
    %921 = vmatprep.subr.bf16.mxu0 0
    %922 = vmatpush1.bf16.msra.mxu0 %v789
    %923 = vmatprep.subr.bf16.mxu0 0
    %924 = vmatpush1.bf16.msra.mxu0 %v786
    %925 = vmatprep.subr.bf16.mxu0 0
    %926 = vmatpush1.bf16.msra.mxu0 %v783
    %927 = vmatprep.subr.bf16.mxu0 0
    %928 = vmatpush1.bf16.msra.mxu0 %v780
    %929 = vmatprep.subr.bf16.mxu0 0
    %930 = vmatpush1.bf16.msra.mxu0 %v777
    %931 = vmatprep.subr.bf16.mxu0 0
    %932 = vmatpush1.bf16.msra.mxu0 %v774
    %933 = vmatprep.subr.bf16.mxu0 0
    %934 = vmatpush2.bf16.msra.mxu0 %v819
    %935 = vmatprep.subr.bf16.mxu0 0
    %936 = vmatpush2.bf16.msra.mxu0 %v816
    %937 = vmatprep.subr.bf16.mxu0 0
    %938 = vmatpush2.bf16.msra.mxu0 %v813
    %939 = vmatprep.subr.bf16.mxu0 0
    %940 = vmatpush2.bf16.msra.mxu0 %v810
    %941 = vmatprep.subr.bf16.mxu0 0
    %942 = vmatpush2.bf16.msra.mxu0 %v807
    %943 = vmatprep.subr.bf16.mxu0 0
    %944 = vmatpush2.bf16.msra.mxu0 %v804
    %945 = vmatprep.subr.bf16.mxu0 0
    %946 = vmatpush2.bf16.msra.mxu0 %v801
    %947 = vmatprep.subr.bf16.mxu0 0
    %948 = vmatpush2.bf16.msra.mxu0 %v798
    %949 = vmatprep.mubr.bf16.mxu0 %v481
    %950 = vmatmul.mubr.bf16.gmra.mxu0 %v480
    %v951 = vpop.f32.mrf.mxu0
    %v952 = vadd.f32 0.0, %v951
    %v953 = vpop.f32.mrf.mxu0
    %v954 = vpop.f32.mrf.mxu0
    %v955 = vadd.f32 0.0, %v954
    %v956 = vpop.f32.mrf.mxu0
    %957 = vmatprep.mubr.bf16.mxu0 %v483
    %958 = vmatmul.mubr.bf16.gmra.mxu0 %v482
    %v959 = vpop.f32.mrf.mxu0
    %v960 = vpop.f32.mrf.mxu0
    %v961 = vpop.f32.mrf.mxu0
    %v962 = vpop.f32.mrf.mxu0
    %963 = vdwg.mxu0
    %964 = vmatprep.subr.bf16.mxu0 %v794
    %965 = vmatpush1.bf16.msra.mxu0 %v793
    %966 = vmatprep.subr.bf16.mxu0 %v791
    %967 = vmatpush1.bf16.msra.mxu0 %v790
    %968 = vmatprep.subr.bf16.mxu0 %v788
    %969 = vmatpush1.bf16.msra.mxu0 %v787
    %970 = vmatprep.subr.bf16.mxu0 %v785
    %971 = vmatpush1.bf16.msra.mxu0 %v784
    %972 = vmatprep.subr.bf16.mxu0 %v782
    %973 = vmatpush1.bf16.msra.mxu0 %v781
    %974 = vmatprep.subr.bf16.mxu0 %v779
    %975 = vmatpush1.bf16.msra.mxu0 %v778
    %976 = vmatprep.subr.bf16.mxu0 %v776
    %977 = vmatpush1.bf16.msra.mxu0 %v775
    %978 = vmatprep.subr.bf16.mxu0 %v773
    %979 = vmatpush1.bf16.msra.mxu0 %v772
    %980 = vmatprep.subr.bf16.mxu0 %v818
    %981 = vmatpush2.bf16.msra.mxu0 %v817
    %982 = vmatprep.subr.bf16.mxu0 %v815
    %983 = vmatpush2.bf16.msra.mxu0 %v814
    %984 = vmatprep.subr.bf16.mxu0 %v812
    %985 = vmatpush2.bf16.msra.mxu0 %v811
    %986 = vmatprep.subr.bf16.mxu0 %v809
    %987 = vmatpush2.bf16.msra.mxu0 %v808
    %988 = vmatprep.subr.bf16.mxu0 %v806
    %989 = vmatpush2.bf16.msra.mxu0 %v805
    %990 = vmatprep.subr.bf16.mxu0 %v803
    %991 = vmatpush2.bf16.msra.mxu0 %v802
    %992 = vmatprep.subr.bf16.mxu0 %v800
    %993 = vmatpush2.bf16.msra.mxu0 %v799
    %994 = vmatprep.subr.bf16.mxu0 %v797
    %995 = vmatpush2.bf16.msra.mxu0 %v796
    %996 = vmatprep.mubr.bf16.mxu0 %v461
    %997 = vmatmul.mubr.bf16.gmra.mxu0 %v460
    %v998 = vpop.f32.mrf.mxu0
    %v999 = vpop.f32.mrf.mxu0
    %v1000 = vpop.f32.mrf.mxu0
    %v1001 = vpop.f32.mrf.mxu0
    %1002 = vmatprep.mubr.bf16.mxu0 %v463
    %1003 = vmatmul.mubr.bf16.gmra.mxu0 %v462
    %v1004 = vpop.f32.mrf.mxu0
    %v1005 = vadd.f32 %v909, %v1004
    %v1006 = vpop.f32.mrf.mxu0
    %v1007 = vadd.f32 %v911, %v1006
    %v1008 = vpop.f32.mrf.mxu0
    %v1009 = vadd.f32 %v913, %v1008
    %v1010 = vpop.f32.mrf.mxu0
    %v1011 = vadd.f32 %v915, %v1010
    %1012 = vdwg.mxu0
    %1013 = vmatprep.subr.bf16.mxu0 0
    %1014 = vmatpush1.bf16.msra.mxu0 %v795
    %1015 = vmatprep.subr.bf16.mxu0 0
    %1016 = vmatpush1.bf16.msra.mxu0 %v792
    %1017 = vmatprep.subr.bf16.mxu0 0
    %1018 = vmatpush1.bf16.msra.mxu0 %v789
    %1019 = vmatprep.subr.bf16.mxu0 0
    %1020 = vmatpush1.bf16.msra.mxu0 %v786
    %1021 = vmatprep.subr.bf16.mxu0 0
    %1022 = vmatpush1.bf16.msra.mxu0 %v783
    %1023 = vmatprep.subr.bf16.mxu0 0
    %1024 = vmatpush1.bf16.msra.mxu0 %v780
    %1025 = vmatprep.subr.bf16.mxu0 0
    %1026 = vmatpush1.bf16.msra.mxu0 %v777
    %1027 = vmatprep.subr.bf16.mxu0 0
    %1028 = vmatpush1.bf16.msra.mxu0 %v774
    %1029 = vmatprep.subr.bf16.mxu0 0
    %1030 = vmatpush2.bf16.msra.mxu0 %v819
    %1031 = vmatprep.subr.bf16.mxu0 0
    %1032 = vmatpush2.bf16.msra.mxu0 %v816
    %1033 = vmatprep.subr.bf16.mxu0 0
    %1034 = vmatpush2.bf16.msra.mxu0 %v813
    %1035 = vmatprep.subr.bf16.mxu0 0
    %1036 = vmatpush2.bf16.msra.mxu0 %v810
    %1037 = vmatprep.subr.bf16.mxu0 0
    %1038 = vmatpush2.bf16.msra.mxu0 %v807
    %1039 = vmatprep.subr.bf16.mxu0 0
    %1040 = vmatpush2.bf16.msra.mxu0 %v804
    %1041 = vmatprep.subr.bf16.mxu0 0
    %1042 = vmatpush2.bf16.msra.mxu0 %v801
    %1043 = vmatprep.subr.bf16.mxu0 0
    %1044 = vmatpush2.bf16.msra.mxu0 %v798
    %1045 = vmatprep.mubr.bf16.mxu0 %v461
    %1046 = vmatmul.mubr.bf16.gmra.mxu0 %v460
    %v1047 = vpop.f32.mrf.mxu0
    %v1048 = vadd.f32 %v952, %v1047
    %v1049 = vpop.f32.mrf.mxu0
    %v1050 = vpop.f32.mrf.mxu0
    %v1051 = vadd.f32 %v955, %v1050
    %v1052 = vpop.f32.mrf.mxu0
    %1053 = vmatprep.mubr.bf16.mxu0 %v463
    %1054 = vmatmul.mubr.bf16.gmra.mxu0 %v462
    %v1055 = vpop.f32.mrf.mxu0
    %v1056 = vpop.f32.mrf.mxu0
    %v1057 = vpop.f32.mrf.mxu0
    %v1058 = vpop.f32.mrf.mxu0
    %1059 = vdwg.mxu0
    %v1124 = vunpack.c.l.b16 %v548
    %v1125 = vunpack.c.h.b16 %v548
    %v1126 = vunpack.c.l.b16 %v549
    %v1127 = vunpack.c.l.b16 %v550
    %v1128 = vunpack.c.h.b16 %v550
    %v1129 = vunpack.c.l.b16 %v551
    %v1130 = vunpack.c.l.b16 %v552
    %v1131 = vunpack.c.h.b16 %v552
    %v1132 = vunpack.c.l.b16 %v553
    %v1133 = vunpack.c.l.b16 %v554
    %v1134 = vunpack.c.h.b16 %v554
    %v1135 = vunpack.c.l.b16 %v555
    %v1136 = vunpack.c.l.b16 %v556
    %v1137 = vunpack.c.h.b16 %v556
    %v1138 = vunpack.c.l.b16 %v557
    %v1139 = vunpack.c.l.b16 %v558
    %v1140 = vunpack.c.h.b16 %v558
    %v1141 = vunpack.c.l.b16 %v559
    %v1142 = vunpack.c.l.b16 %v560
    %v1143 = vunpack.c.h.b16 %v560
    %v1144 = vunpack.c.l.b16 %v561
    %v1145 = vunpack.c.l.b16 %v562
    %v1146 = vunpack.c.h.b16 %v562
    %v1147 = vunpack.c.l.b16 %v563
    %v1148 = vunpack.c.l.b16 %v564
    %v1149 = vunpack.c.h.b16 %v564
    %v1150 = vunpack.c.l.b16 %v565
    %v1151 = vunpack.c.l.b16 %v566
    %v1152 = vunpack.c.h.b16 %v566
    %v1153 = vunpack.c.l.b16 %v567
    %v1154 = vunpack.c.l.b16 %v568
    %v1155 = vunpack.c.h.b16 %v568
    %v1156 = vunpack.c.l.b16 %v569
    %v1157 = vunpack.c.l.b16 %v570
    %v1158 = vunpack.c.h.b16 %v570
    %v1159 = vunpack.c.l.b16 %v571
    %v1160 = vunpack.c.l.b16 %v572
    %v1161 = vunpack.c.h.b16 %v572
    %v1162 = vunpack.c.l.b16 %v573
    %v1163 = vunpack.c.l.b16 %v574
    %v1164 = vunpack.c.h.b16 %v574
    %v1165 = vunpack.c.l.b16 %v575
    %v1166 = vunpack.c.l.b16 %v576
    %v1167 = vunpack.c.h.b16 %v576
    %v1168 = vunpack.c.l.b16 %v577
    %v1169 = vunpack.c.l.b16 %v578
    %v1170 = vunpack.c.h.b16 %v578
    %v1171 = vunpack.c.l.b16 %v579
    %v1172 = vunpack.c.l.b16 %v580
    %v1173 = vunpack.c.h.b16 %v580
    %v1174 = vunpack.c.l.b16 %v581
    %v1175 = vunpack.c.l.b16 %v582
    %v1176 = vunpack.c.h.b16 %v582
    %v1177 = vunpack.c.l.b16 %v583
    %v1178 = vunpack.c.l.b16 %v584
    %v1179 = vunpack.c.h.b16 %v584
    %v1180 = vunpack.c.l.b16 %v585
    %v1181 = vunpack.c.l.b16 %v586
    %v1182 = vunpack.c.h.b16 %v586
    %v1183 = vunpack.c.l.b16 %v587
    %v1184 = vunpack.c.l.b16 %v588
    %v1185 = vunpack.c.h.b16 %v588
    %v1186 = vunpack.c.l.b16 %v589
    %v1187 = vunpack.c.l.b16 %v590
    %v1188 = vunpack.c.h.b16 %v590
    %v1189 = vunpack.c.l.b16 %v591
    %v1190 = vunpack.c.l.b16 %v592
    %v1191 = vunpack.c.h.b16 %v592
    %v1192 = vunpack.c.l.b16 %v593
    %v1193 = vunpack.c.l.b16 %v594
    %v1194 = vunpack.c.h.b16 %v594
    %v1195 = vunpack.c.l.b16 %v595
    %v1196 = vunpack.c.l.b16 %v596
    %v1197 = vunpack.c.h.b16 %v596
    %v1198 = vunpack.c.l.b16 %v597
    %v1199 = vunpack.c.l.b16 %v598
    %v1200 = vunpack.c.h.b16 %v598
    %v1201 = vunpack.c.l.b16 %v599
    %v1202 = vunpack.c.l.b16 %v600
    %v1203 = vunpack.c.h.b16 %v600
    %v1204 = vunpack.c.l.b16 %v601
    %v1205 = vunpack.c.l.b16 %v602
    %v1206 = vunpack.c.h.b16 %v602
    %v1207 = vunpack.c.l.b16 %v603
    %v1208 = vunpack.c.l.b16 %v604
    %v1209 = vunpack.c.h.b16 %v604
    %v1210 = vunpack.c.l.b16 %v605
    %v1211 = vunpack.c.l.b16 %v606
    %v1212 = vunpack.c.h.b16 %v606
    %v1213 = vunpack.c.l.b16 %v607
    %v1214 = vunpack.c.l.b16 %v608
    %v1215 = vunpack.c.h.b16 %v608
    %v1216 = vunpack.c.l.b16 %v609
    %v1217 = vunpack.c.l.b16 %v610
    %v1218 = vunpack.c.h.b16 %v610
    %v1219 = vunpack.c.l.b16 %v611
    %v1220 = vpack.c.b16 %v1127, %v1124
    %v1221 = vpack.c.b16 %v1128, %v1125
    %v1222 = vpack.c.b16 %v1129, %v1126
    %v1223 = vpack.c.b16 %v1133, %v1130
    %v1224 = vpack.c.b16 %v1134, %v1131
    %v1225 = vpack.c.b16 %v1135, %v1132
    %v1226 = vpack.c.b16 %v1139, %v1136
    %v1227 = vpack.c.b16 %v1140, %v1137
    %v1228 = vpack.c.b16 %v1141, %v1138
    %v1229 = vpack.c.b16 %v1145, %v1142
    %v1230 = vpack.c.b16 %v1146, %v1143
    %v1231 = vpack.c.b16 %v1147, %v1144
    %v1232 = vpack.c.b16 %v1151, %v1148
    %v1233 = vpack.c.b16 %v1152, %v1149
    %v1234 = vpack.c.b16 %v1153, %v1150
    %v1235 = vpack.c.b16 %v1157, %v1154
    %v1236 = vpack.c.b16 %v1158, %v1155
    %v1237 = vpack.c.b16 %v1159, %v1156
    %v1238 = vpack.c.b16 %v1163, %v1160
    %v1239 = vpack.c.b16 %v1164, %v1161
    %v1240 = vpack.c.b16 %v1165, %v1162
    %v1241 = vpack.c.b16 %v1169, %v1166
    %v1242 = vpack.c.b16 %v1170, %v1167
    %v1243 = vpack.c.b16 %v1171, %v1168
    %v1244 = vpack.c.b16 %v1175, %v1172
    %v1245 = vpack.c.b16 %v1176, %v1173
    %v1246 = vpack.c.b16 %v1177, %v1174
    %v1247 = vpack.c.b16 %v1181, %v1178
    %v1248 = vpack.c.b16 %v1182, %v1179
    %v1249 = vpack.c.b16 %v1183, %v1180
    %v1250 = vpack.c.b16 %v1187, %v1184
    %v1251 = vpack.c.b16 %v1188, %v1185
    %v1252 = vpack.c.b16 %v1189, %v1186
    %v1253 = vpack.c.b16 %v1193, %v1190
    %v1254 = vpack.c.b16 %v1194, %v1191
    %v1255 = vpack.c.b16 %v1195, %v1192
    %v1256 = vpack.c.b16 %v1199, %v1196
    %v1257 = vpack.c.b16 %v1200, %v1197
    %v1258 = vpack.c.b16 %v1201, %v1198
    %v1259 = vpack.c.b16 %v1205, %v1202
    %v1260 = vpack.c.b16 %v1206, %v1203
    %v1261 = vpack.c.b16 %v1207, %v1204
    %v1262 = vpack.c.b16 %v1211, %v1208
    %v1263 = vpack.c.b16 %v1212, %v1209
    %v1264 = vpack.c.b16 %v1213, %v1210
    %v1265 = vpack.c.b16 %v1217, %v1214
    %v1266 = vpack.c.b16 %v1218, %v1215
    %v1267 = vpack.c.b16 %v1219, %v1216
    %1316 = vmatprep.subr.bf16.mxu0 %v1242
    %1317 = vmatpush1.bf16.msra.mxu0 %v1241
    %1318 = vmatprep.subr.bf16.mxu0 %v1239
    %1319 = vmatpush1.bf16.msra.mxu0 %v1238
    %1320 = vmatprep.subr.bf16.mxu0 %v1236
    %1321 = vmatpush1.bf16.msra.mxu0 %v1235
    %1322 = vmatprep.subr.bf16.mxu0 %v1233
    %1323 = vmatpush1.bf16.msra.mxu0 %v1232
    %1324 = vmatprep.subr.bf16.mxu0 %v1230
    %1325 = vmatpush1.bf16.msra.mxu0 %v1229
    %1326 = vmatprep.subr.bf16.mxu0 %v1227
    %1327 = vmatpush1.bf16.msra.mxu0 %v1226
    %1328 = vmatprep.subr.bf16.mxu0 %v1224
    %1329 = vmatpush1.bf16.msra.mxu0 %v1223
    %1330 = vmatprep.subr.bf16.mxu0 %v1221
    %1331 = vmatpush1.bf16.msra.mxu0 %v1220
    %1332 = vmatprep.subr.bf16.mxu0 %v1266
    %1333 = vmatpush2.bf16.msra.mxu0 %v1265
    %1334 = vmatprep.subr.bf16.mxu0 %v1263
    %1335 = vmatpush2.bf16.msra.mxu0 %v1262
    %1336 = vmatprep.subr.bf16.mxu0 %v1260
    %1337 = vmatpush2.bf16.msra.mxu0 %v1259
    %1338 = vmatprep.subr.bf16.mxu0 %v1257
    %1339 = vmatpush2.bf16.msra.mxu0 %v1256
    %1340 = vmatprep.subr.bf16.mxu0 %v1254
    %1341 = vmatpush2.bf16.msra.mxu0 %v1253
    %1342 = vmatprep.subr.bf16.mxu0 %v1251
    %1343 = vmatpush2.bf16.msra.mxu0 %v1250
    %1344 = vmatprep.subr.bf16.mxu0 %v1248
    %1345 = vmatpush2.bf16.msra.mxu0 %v1247
    %1346 = vmatprep.subr.bf16.mxu0 %v1245
    %1347 = vmatpush2.bf16.msra.mxu0 %v1244
    %1348 = vmatprep.mubr.bf16.mxu0 %v461
    %1349 = vmatmul.mubr.bf16.gmra.mxu0 %v460
    %v1350 = vpop.f32.mrf.mxu0
    %v1351 = vpop.f32.mrf.mxu0
    %v1352 = vpop.f32.mrf.mxu0
    %v1353 = vpop.f32.mrf.mxu0
    %1354 = vmatprep.mubr.bf16.mxu0 %v463
    %1355 = vmatmul.mubr.bf16.gmra.mxu0 %v462
    %v1356 = vpop.f32.mrf.mxu0
    %v1357 = vadd.f32 0.0, %v1356
    %v1358 = vpop.f32.mrf.mxu0
    %v1359 = vadd.f32 0.0, %v1358
    %v1360 = vpop.f32.mrf.mxu0
    %v1361 = vadd.f32 0.0, %v1360
    %v1362 = vpop.f32.mrf.mxu0
    %v1363 = vadd.f32 0.0, %v1362
    %1364 = vdwg.mxu0
    %1365 = vmatprep.subr.bf16.mxu0 0
    %1366 = vmatpush1.bf16.msra.mxu0 %v1243
    %1367 = vmatprep.subr.bf16.mxu0 0
    %1368 = vmatpush1.bf16.msra.mxu0 %v1240
    %1369 = vmatprep.subr.bf16.mxu0 0
    %1370 = vmatpush1.bf16.msra.mxu0 %v1237
    %1371 = vmatprep.subr.bf16.mxu0 0
    %1372 = vmatpush1.bf16.msra.mxu0 %v1234
    %1373 = vmatprep.subr.bf16.mxu0 0
    %1374 = vmatpush1.bf16.msra.mxu0 %v1231
    %1375 = vmatprep.subr.bf16.mxu0 0
    %1376 = vmatpush1.bf16.msra.mxu0 %v1228
    %1377 = vmatprep.subr.bf16.mxu0 0
    %1378 = vmatpush1.bf16.msra.mxu0 %v1225
    %1379 = vmatprep.subr.bf16.mxu0 0
    %1380 = vmatpush1.bf16.msra.mxu0 %v1222
    %1381 = vmatprep.subr.bf16.mxu0 0
    %1382 = vmatpush2.bf16.msra.mxu0 %v1267
    %1383 = vmatprep.subr.bf16.mxu0 0
    %1384 = vmatpush2.bf16.msra.mxu0 %v1264
    %1385 = vmatprep.subr.bf16.mxu0 0
    %1386 = vmatpush2.bf16.msra.mxu0 %v1261
    %1387 = vmatprep.subr.bf16.mxu0 0
    %1388 = vmatpush2.bf16.msra.mxu0 %v1258
    %1389 = vmatprep.subr.bf16.mxu0 0
    %1390 = vmatpush2.bf16.msra.mxu0 %v1255
    %1391 = vmatprep.subr.bf16.mxu0 0
    %1392 = vmatpush2.bf16.msra.mxu0 %v1252
    %1393 = vmatprep.subr.bf16.mxu0 0
    %1394 = vmatpush2.bf16.msra.mxu0 %v1249
    %1395 = vmatprep.subr.bf16.mxu0 0
    %1396 = vmatpush2.bf16.msra.mxu0 %v1246
    %1397 = vmatprep.mubr.bf16.mxu0 %v461
    %1398 = vmatmul.mubr.bf16.gmra.mxu0 %v460
    %v1399 = vpop.f32.mrf.mxu0
    %v1400 = vadd.f32 0.0, %v1399
    %v1401 = vpop.f32.mrf.mxu0
    %v1402 = vpop.f32.mrf.mxu0
    %v1403 = vadd.f32 0.0, %v1402
    %v1404 = vpop.f32.mrf.mxu0
    %1405 = vmatprep.mubr.bf16.mxu0 %v463
    %1406 = vmatmul.mubr.bf16.gmra.mxu0 %v462
    %v1407 = vpop.f32.mrf.mxu0
    %v1408 = vpop.f32.mrf.mxu0
    %v1409 = vpop.f32.mrf.mxu0
    %v1410 = vpop.f32.mrf.mxu0
    %1411 = vdwg.mxu0
    %v1412 = vadd.f32 %v1048, %v1400
    %v1413 = vadd.f32 %v1051, %v1403
    %v1414 = vadd.f32 %v1005, %v1357
    %v1415 = vadd.f32 %v1007, %v1359
    %v1416 = vadd.f32 %v1009, %v1361
    %v1417 = vadd.f32 %v1011, %v1363
    %v1418 = vld [vmem:[%s7] sm:$0x7]
    %v1420 = vlaneseq
    %v1421 = vshrl.u32 %v1420, 7
    %v1422 = vsub.s32 0, %v1421
    %v1423 = vrot.slane %v1418, %v1422
    %v1424 = vlaneseq
    %v1425 = vshrl.u32 %v1424, 7
    %v1426 = vsub.s32 1, %v1425
    %v1427 = vrot.slane %v1418, %v1426
    %v1428 = vlaneseq
    %v1429 = vshrl.u32 %v1428, 7
    %v1430 = vsub.s32 2, %v1429
    %v1431 = vrot.slane %v1418, %v1430
    %v1435 = vadd.f32 %v1412, %v1431
    %v1436 = vadd.f32 %v1413, %v1431
    %v1437 = vadd.f32 %v1414, %v1423
    %v1438 = vadd.f32 %v1415, %v1427
    %v1439 = vadd.f32 %v1416, %v1423
    %v1440 = vadd.f32 %v1417, %v1427
    %v1441 = vadd.f32 %v1435, %v447
    %v1442 = vadd.f32 %v1436, %v450
    %v1443 = vadd.f32 %v1441, %v1438
    %v1444 = vadd.f32 %v1442, %v1440
    %1445 = vst [vmem:[%s10] sm:$0xff] %v1443
    %1446 = vst [vmem:[%s10 + $0x8] sm:$0xff] %v1444
    %v1447 = vmul.f32 %v446, %v1443
    %v1448 = vmul.f32 %v449, %v1444
    %v1449 = vmul.f32 %v1447, %v1437
    %v1450 = vmul.f32 %v1448, %v1439
    %v1451 = vpack.c.bf16 %v1450, %v1449
    %v1452 = vunpack.c.l.bf16 %v1451
    %v1453 = vunpack.c.h.bf16 %v1451
    %v1454 = vsub.f32 %v1449, %v1452
    %v1455 = vsub.f32 %v1450, %v1453
    %v1456 = vpack.c.bf16 %v1455, %v1454
    %v1457 = vld [vmem:[%s8] sm:$0xf]
    %v1458 = vld [vmem:[%s8 + $0x4] sm:$0xf]
    %v1459 = vld [vmem:[%s8 + $0x8] sm:$0xf]
    %v1460 = vld [vmem:[%s8 + $0xc] sm:$0xf]
    %v1461 = vld [vmem:[%s8 + $0x10] sm:$0xf]
    %v1462 = vld [vmem:[%s8 + $0x14] sm:$0xf]
    %v1463 = vld [vmem:[%s8 + $0x18] sm:$0xf]
    %v1464 = vld [vmem:[%s8 + $0x1c] sm:$0xf]
    %v1465 = vld [vmem:[%s8 + $0x20] sm:$0xf]
    %v1466 = vld [vmem:[%s8 + $0x24] sm:$0xf]
    %v1467 = vld [vmem:[%s8 + $0x28] sm:$0xf]
    %v1468 = vld [vmem:[%s8 + $0x2c] sm:$0xf]
    %v1469 = vld [vmem:[%s8 + $0x30] sm:$0xf]
    %v1470 = vld [vmem:[%s8 + $0x34] sm:$0xf]
    %v1471 = vld [vmem:[%s8 + $0x38] sm:$0xf]
    %v1472 = vld [vmem:[%s8 + $0x3c] sm:$0xf]
    %v1489 = vunpack.c.l.b16 %v1457
    %v1490 = vunpack.c.l.b16 %v1458
    %v1491 = vunpack.c.l.b16 %v1459
    %v1492 = vunpack.c.l.b16 %v1460
    %v1493 = vunpack.c.l.b16 %v1461
    %v1494 = vunpack.c.l.b16 %v1462
    %v1495 = vunpack.c.l.b16 %v1463
    %v1496 = vunpack.c.l.b16 %v1464
    %v1497 = vunpack.c.l.b16 %v1465
    %v1498 = vunpack.c.l.b16 %v1466
    %v1499 = vunpack.c.l.b16 %v1467
    %v1500 = vunpack.c.l.b16 %v1468
    %v1501 = vunpack.c.l.b16 %v1469
    %v1502 = vunpack.c.l.b16 %v1470
    %v1503 = vunpack.c.l.b16 %v1471
    %v1504 = vunpack.c.l.b16 %v1472
    %v1505 = vpack.c.b16 %v1490, %v1489
    %v1506 = vpack.c.b16 %v1492, %v1491
    %v1507 = vpack.c.b16 %v1494, %v1493
    %v1508 = vpack.c.b16 %v1496, %v1495
    %v1509 = vpack.c.b16 %v1498, %v1497
    %v1510 = vpack.c.b16 %v1500, %v1499
    %v1511 = vpack.c.b16 %v1502, %v1501
    %v1512 = vpack.c.b16 %v1504, %v1503
    %1521 = vmatprep.subr.bf16.mxu0 0
    %1522 = vmatpush1.bf16.msra.mxu0 %v1512
    %1523 = vmatprep.subr.bf16.mxu0 0
    %1524 = vmatpush1.bf16.msra.mxu0 %v1511
    %1525 = vmatprep.subr.bf16.mxu0 0
    %1526 = vmatpush1.bf16.msra.mxu0 %v1510
    %1527 = vmatprep.subr.bf16.mxu0 0
    %1528 = vmatpush1.bf16.msra.mxu0 %v1509
    %1529 = vmatprep.subr.bf16.mxu0 0
    %1530 = vmatpush1.bf16.msra.mxu0 %v1508
    %1531 = vmatprep.subr.bf16.mxu0 0
    %1532 = vmatpush1.bf16.msra.mxu0 %v1507
    %1533 = vmatprep.subr.bf16.mxu0 0
    %1534 = vmatpush1.bf16.msra.mxu0 %v1506
    %1535 = vmatprep.subr.bf16.mxu0 0
    %1536 = vmatpush1.bf16.msra.mxu0 %v1505
    %1537 = vmatprep.subr.bf16.mxu0 0
    %1538 = vmatpush2.bf16.msra.mxu0 0
    %1539 = vmatprep.subr.bf16.mxu0 0
    %1540 = vmatpush2.bf16.msra.mxu0 0
    %1541 = vmatprep.subr.bf16.mxu0 0
    %1542 = vmatpush2.bf16.msra.mxu0 0
    %1543 = vmatprep.subr.bf16.mxu0 0
    %1544 = vmatpush2.bf16.msra.mxu0 0
    %1545 = vmatprep.subr.bf16.mxu0 0
    %1546 = vmatpush2.bf16.msra.mxu0 0
    %1547 = vmatprep.subr.bf16.mxu0 0
    %1548 = vmatpush2.bf16.msra.mxu0 0
    %1549 = vmatprep.subr.bf16.mxu0 0
    %1550 = vmatpush2.bf16.msra.mxu0 0
    %1551 = vmatprep.subr.bf16.mxu0 0
    %1552 = vmatpush2.bf16.msra.mxu0 0
    %1553 = vmatprep.mubr.bf16.mxu0 0
    %1554 = vmatmul.mubr.bf16.gmra.mxu0 %v1456
    %v1555 = vpop.f32.mrf.mxu0
    %v1556 = vadd.f32 0.0, %v1555
    %v1557 = vpop.f32.mrf.mxu0
    %v1558 = vpop.f32.mrf.mxu0
    %v1559 = vadd.f32 0.0, %v1558
    %v1560 = vpop.f32.mrf.mxu0
    %1561 = vdwg.mxu0
    %1562 = vmatprep.subr.bf16.mxu0 0
    %1563 = vmatpush1.bf16.msra.mxu0 %v1512
    %1564 = vmatprep.subr.bf16.mxu0 0
    %1565 = vmatpush1.bf16.msra.mxu0 %v1511
    %1566 = vmatprep.subr.bf16.mxu0 0
    %1567 = vmatpush1.bf16.msra.mxu0 %v1510
    %1568 = vmatprep.subr.bf16.mxu0 0
    %1569 = vmatpush1.bf16.msra.mxu0 %v1509
    %1570 = vmatprep.subr.bf16.mxu0 0
    %1571 = vmatpush1.bf16.msra.mxu0 %v1508
    %1572 = vmatprep.subr.bf16.mxu0 0
    %1573 = vmatpush1.bf16.msra.mxu0 %v1507
    %1574 = vmatprep.subr.bf16.mxu0 0
    %1575 = vmatpush1.bf16.msra.mxu0 %v1506
    %1576 = vmatprep.subr.bf16.mxu0 0
    %1577 = vmatpush1.bf16.msra.mxu0 %v1505
    %1578 = vmatprep.subr.bf16.mxu0 0
    %1579 = vmatpush2.bf16.msra.mxu0 0
    %1580 = vmatprep.subr.bf16.mxu0 0
    %1581 = vmatpush2.bf16.msra.mxu0 0
    %1582 = vmatprep.subr.bf16.mxu0 0
    %1583 = vmatpush2.bf16.msra.mxu0 0
    %1584 = vmatprep.subr.bf16.mxu0 0
    %1585 = vmatpush2.bf16.msra.mxu0 0
    %1586 = vmatprep.subr.bf16.mxu0 0
    %1587 = vmatpush2.bf16.msra.mxu0 0
    %1588 = vmatprep.subr.bf16.mxu0 0
    %1589 = vmatpush2.bf16.msra.mxu0 0
    %1590 = vmatprep.subr.bf16.mxu0 0
    %1591 = vmatpush2.bf16.msra.mxu0 0
    %1592 = vmatprep.subr.bf16.mxu0 0
    %1593 = vmatpush2.bf16.msra.mxu0 0
    %1594 = vmatprep.mubr.bf16.mxu0 0
    %1595 = vmatmul.mubr.bf16.gmra.mxu0 %v1451
    %v1596 = vpop.f32.mrf.mxu0
    %v1597 = vadd.f32 %v1556, %v1596
    %v1598 = vpop.f32.mrf.mxu0
    %v1599 = vpop.f32.mrf.mxu0
    %v1600 = vadd.f32 %v1559, %v1599
    %v1601 = vpop.f32.mrf.mxu0
    %1602 = vdwg.mxu0
    %v1603 = vpack.c.bf16 %v451, %v448
    %v1604 = vunpack.c.l.bf16 %v1603
    %v1605 = vunpack.c.h.bf16 %v1603
    %v1606 = vsub.f32 %v448, %v1604
    %v1607 = vsub.f32 %v451, %v1605
    %v1608 = vpack.c.bf16 %v1607, %v1606
    %vm1609 = vcmask 64512
    %v1610 = vsel %vm1609, %v1597, -inf
    %v1611 = vrot.slane %v1610, 4
    %v1612 = vmax.f32 %v1610, %v1611
    %v1613 = vrot.slane %v1612, 2
    %v1614 = vmax.f32 %v1612, %v1613
    %v1615 = vrot.slane %v1614, 1
    %v1616 = vmax.f32 %v1614, %v1615
    %v1617 = vsub.f32 %v1597, %v1616
    %v1618 = vmul.f32 %v1617, 1.442695
    %v1619 = vpow.pop %v1618
    %v1620 = vsel %vm1609, %v1619, 0.0
    %v1621 = vrot.slane %v1620, 4
    %v1622 = vadd.f32 %v1620, %v1621
    %v1623 = vrot.slane %v1622, 2
    %v1624 = vadd.f32 %v1622, %v1623
    %v1625 = vrot.slane %v1624, 1
    %v1626 = vadd.f32 %v1624, %v1625
    %v1627 = vrcp.pop %v1626
    %v1628 = vmul.f32 %v1619, %v1627
    %v1629 = vpack.c.bf16 %v1628, %v1628
    %v1630 = vunpack.c.l.bf16 %v1629
    %v1631 = vsub.f32 %v1628, %v1630
    %v1632 = vpack.c.bf16 %v1631, %v1631
    %v1634 = vsel %vm1609, %v1632, 0
    %vm1636 = vcmask 1043456
    %v1638 = vsel %vm1636, %v1603, 0
    %1640 = vmatprep.subr.bf16.mxu0 0
    %1641 = vmatpush1.bf16.msra.mxu0 0
    %1642 = vmatprep.subr.bf16.mxu0 0
    %1643 = vmatpush1.bf16.msra.mxu0 0
    %1644 = vmatprep.subr.bf16.mxu0 0
    %1645 = vmatpush1.bf16.msra.mxu0 0
    %1646 = vmatprep.subr.bf16.mxu0 0
    %1647 = vmatpush1.bf16.msra.mxu0 0
    %1648 = vmatprep.subr.bf16.mxu0 0
    %1649 = vmatpush1.bf16.msra.mxu0 0
    %1650 = vmatprep.subr.bf16.mxu0 0
    %1651 = vmatpush1.bf16.msra.mxu0 0
    %1652 = vmatprep.subr.bf16.mxu0 0
    %1653 = vmatpush1.bf16.msra.mxu0 0
    %1654 = vmatprep.subr.bf16.mxu0 0
    %1655 = vmatpush1.bf16.msra.mxu0 %v1638
    %1656 = vmatprep.subr.bf16.mxu0 0
    %1657 = vmatpush2.bf16.msra.mxu0 0
    %1658 = vmatprep.subr.bf16.mxu0 0
    %1659 = vmatpush2.bf16.msra.mxu0 0
    %1660 = vmatprep.subr.bf16.mxu0 0
    %1661 = vmatpush2.bf16.msra.mxu0 0
    %1662 = vmatprep.subr.bf16.mxu0 0
    %1663 = vmatpush2.bf16.msra.mxu0 0
    %1664 = vmatprep.subr.bf16.mxu0 0
    %1665 = vmatpush2.bf16.msra.mxu0 0
    %1666 = vmatprep.subr.bf16.mxu0 0
    %1667 = vmatpush2.bf16.msra.mxu0 0
    %1668 = vmatprep.subr.bf16.mxu0 0
    %1669 = vmatpush2.bf16.msra.mxu0 0
    %1670 = vmatprep.subr.bf16.mxu0 0
    %1671 = vmatpush2.bf16.msra.mxu0 0
    %1672 = vmatprep.mubr.bf16.mxu0 0
    %1673 = vmatmul.mubr.bf16.gmra.mxu0 %v1634
    %v1674 = vpop.f32.mrf.mxu0
    %v1675 = vadd.f32 0.0, %v1674
    %v1676 = vpop.f32.mrf.mxu0
    %v1677 = vpop.f32.mrf.mxu0
    %v1678 = vpop.f32.mrf.mxu0
    %1679 = vdwg.mxu0
    %v1681 = vsel %vm1609, %v1629, 0
    %1683 = vmatprep.subr.bf16.mxu0 0
    %1684 = vmatpush1.bf16.msra.mxu0 0
    %1685 = vmatprep.subr.bf16.mxu0 0
    %1686 = vmatpush1.bf16.msra.mxu0 0
    %1687 = vmatprep.subr.bf16.mxu0 0
    %1688 = vmatpush1.bf16.msra.mxu0 0
    %1689 = vmatprep.subr.bf16.mxu0 0
    %1690 = vmatpush1.bf16.msra.mxu0 0
    %1691 = vmatprep.subr.bf16.mxu0 0
    %1692 = vmatpush1.bf16.msra.mxu0 0
    %1693 = vmatprep.subr.bf16.mxu0 0
    %1694 = vmatpush1.bf16.msra.mxu0 0
    %1695 = vmatprep.subr.bf16.mxu0 0
    %1696 = vmatpush1.bf16.msra.mxu0 0
    %1697 = vmatprep.subr.bf16.mxu0 0
    %1698 = vmatpush1.bf16.msra.mxu0 %v1638
    %1699 = vmatprep.subr.bf16.mxu0 0
    %1700 = vmatpush2.bf16.msra.mxu0 0
    %1701 = vmatprep.subr.bf16.mxu0 0
    %1702 = vmatpush2.bf16.msra.mxu0 0
    %1703 = vmatprep.subr.bf16.mxu0 0
    %1704 = vmatpush2.bf16.msra.mxu0 0
    %1705 = vmatprep.subr.bf16.mxu0 0
    %1706 = vmatpush2.bf16.msra.mxu0 0
    %1707 = vmatprep.subr.bf16.mxu0 0
    %1708 = vmatpush2.bf16.msra.mxu0 0
    %1709 = vmatprep.subr.bf16.mxu0 0
    %1710 = vmatpush2.bf16.msra.mxu0 0
    %1711 = vmatprep.subr.bf16.mxu0 0
    %1712 = vmatpush2.bf16.msra.mxu0 0
    %1713 = vmatprep.subr.bf16.mxu0 0
    %1714 = vmatpush2.bf16.msra.mxu0 0
    %1715 = vmatprep.mubr.bf16.mxu0 0
    %1716 = vmatmul.mubr.bf16.gmra.mxu0 %v1681
    %v1717 = vpop.f32.mrf.mxu0
    %v1718 = vadd.f32 %v1675, %v1717
    %v1719 = vpop.f32.mrf.mxu0
    %v1720 = vpop.f32.mrf.mxu0
    %v1721 = vpop.f32.mrf.mxu0
    %1722 = vdwg.mxu0
    %v1724 = vsel %vm1636, %v1608, 0
    %1726 = vmatprep.subr.bf16.mxu0 0
    %1727 = vmatpush1.bf16.msra.mxu0 0
    %1728 = vmatprep.subr.bf16.mxu0 0
    %1729 = vmatpush1.bf16.msra.mxu0 0
    %1730 = vmatprep.subr.bf16.mxu0 0
    %1731 = vmatpush1.bf16.msra.mxu0 0
    %1732 = vmatprep.subr.bf16.mxu0 0
    %1733 = vmatpush1.bf16.msra.mxu0 0
    %1734 = vmatprep.subr.bf16.mxu0 0
    %1735 = vmatpush1.bf16.msra.mxu0 0
    %1736 = vmatprep.subr.bf16.mxu0 0
    %1737 = vmatpush1.bf16.msra.mxu0 0
    %1738 = vmatprep.subr.bf16.mxu0 0
    %1739 = vmatpush1.bf16.msra.mxu0 0
    %1740 = vmatprep.subr.bf16.mxu0 0
    %1741 = vmatpush1.bf16.msra.mxu0 %v1724
    %1742 = vmatprep.subr.bf16.mxu0 0
    %1743 = vmatpush2.bf16.msra.mxu0 0
    %1744 = vmatprep.subr.bf16.mxu0 0
    %1745 = vmatpush2.bf16.msra.mxu0 0
    %1746 = vmatprep.subr.bf16.mxu0 0
    %1747 = vmatpush2.bf16.msra.mxu0 0
    %1748 = vmatprep.subr.bf16.mxu0 0
    %1749 = vmatpush2.bf16.msra.mxu0 0
    %1750 = vmatprep.subr.bf16.mxu0 0
    %1751 = vmatpush2.bf16.msra.mxu0 0
    %1752 = vmatprep.subr.bf16.mxu0 0
    %1753 = vmatpush2.bf16.msra.mxu0 0
    %1754 = vmatprep.subr.bf16.mxu0 0
    %1755 = vmatpush2.bf16.msra.mxu0 0
    %1756 = vmatprep.subr.bf16.mxu0 0
    %1757 = vmatpush2.bf16.msra.mxu0 0
    %1758 = vmatprep.mubr.bf16.mxu0 0
    %1759 = vmatmul.mubr.bf16.gmra.mxu0 %v1681
    %v1760 = vpop.f32.mrf.mxu0
    %v1761 = vadd.f32 0.0, %v1760
    %v1762 = vpop.f32.mrf.mxu0
    %v1763 = vpop.f32.mrf.mxu0
    %v1764 = vpop.f32.mrf.mxu0
    %1765 = vdwg.mxu0
    %v1766 = vadd.f32 %v1718, %v1761
    %1767 = vst [vmem:[%s9] sm:$0xff] %v1766
    %v1768 = vsel %vm1609, %v1600, -inf
    %v1769 = vrot.slane %v1768, 4
    %v1770 = vmax.f32 %v1768, %v1769
    %v1771 = vrot.slane %v1770, 2
    %v1772 = vmax.f32 %v1770, %v1771
    %v1773 = vrot.slane %v1772, 1
    %v1774 = vmax.f32 %v1772, %v1773
    %v1775 = vsub.f32 %v1600, %v1774
    %v1776 = vmul.f32 %v1775, 1.442695
    %v1777 = vpow.pop %v1776
    %v1778 = vsel %vm1609, %v1777, 0.0
    %v1779 = vrot.slane %v1778, 4
    %v1780 = vadd.f32 %v1778, %v1779
    %v1781 = vrot.slane %v1780, 2
    %v1782 = vadd.f32 %v1780, %v1781
    %v1783 = vrot.slane %v1782, 1
    %v1784 = vadd.f32 %v1782, %v1783
    %v1785 = vrcp.pop %v1784
    %v1786 = vmul.f32 %v1777, %v1785
    %v1787 = vpack.c.bf16 %v1786, %v1786
    %v1788 = vunpack.c.l.bf16 %v1787
    %v1789 = vsub.f32 %v1786, %v1788
    %v1790 = vpack.c.bf16 %v1789, %v1789
    %v1792 = vrot.slane %v1603, 4
    %v1794 = vsel %vm1609, %v1790, 0
    %v1797 = vsel %vm1636, %v1792, 0
    %1799 = vmatprep.subr.bf16.mxu0 0
    %1800 = vmatpush1.bf16.msra.mxu0 0
    %1801 = vmatprep.subr.bf16.mxu0 0
    %1802 = vmatpush1.bf16.msra.mxu0 0
    %1803 = vmatprep.subr.bf16.mxu0 0
    %1804 = vmatpush1.bf16.msra.mxu0 0
    %1805 = vmatprep.subr.bf16.mxu0 0
    %1806 = vmatpush1.bf16.msra.mxu0 0
    %1807 = vmatprep.subr.bf16.mxu0 0
    %1808 = vmatpush1.bf16.msra.mxu0 0
    %1809 = vmatprep.subr.bf16.mxu0 0
    %1810 = vmatpush1.bf16.msra.mxu0 0
    %1811 = vmatprep.subr.bf16.mxu0 0
    %1812 = vmatpush1.bf16.msra.mxu0 0
    %1813 = vmatprep.subr.bf16.mxu0 0
    %1814 = vmatpush1.bf16.msra.mxu0 %v1797
    %1815 = vmatprep.subr.bf16.mxu0 0
    %1816 = vmatpush2.bf16.msra.mxu0 0
    %1817 = vmatprep.subr.bf16.mxu0 0
    %1818 = vmatpush2.bf16.msra.mxu0 0
    %1819 = vmatprep.subr.bf16.mxu0 0
    %1820 = vmatpush2.bf16.msra.mxu0 0
    %1821 = vmatprep.subr.bf16.mxu0 0
    %1822 = vmatpush2.bf16.msra.mxu0 0
    %1823 = vmatprep.subr.bf16.mxu0 0
    %1824 = vmatpush2.bf16.msra.mxu0 0
    %1825 = vmatprep.subr.bf16.mxu0 0
    %1826 = vmatpush2.bf16.msra.mxu0 0
    %1827 = vmatprep.subr.bf16.mxu0 0
    %1828 = vmatpush2.bf16.msra.mxu0 0
    %1829 = vmatprep.subr.bf16.mxu0 0
    %1830 = vmatpush2.bf16.msra.mxu0 0
    %1831 = vmatprep.mubr.bf16.mxu0 0
    %1832 = vmatmul.mubr.bf16.gmra.mxu0 %v1794
    %v1833 = vpop.f32.mrf.mxu0
    %v1834 = vadd.f32 0.0, %v1833
    %v1835 = vpop.f32.mrf.mxu0
    %v1836 = vpop.f32.mrf.mxu0
    %v1837 = vpop.f32.mrf.mxu0
    %1838 = vdwg.mxu0
    %v1840 = vsel %vm1609, %v1787, 0
    %1842 = vmatprep.subr.bf16.mxu0 0
    %1843 = vmatpush1.bf16.msra.mxu0 0
    %1844 = vmatprep.subr.bf16.mxu0 0
    %1845 = vmatpush1.bf16.msra.mxu0 0
    %1846 = vmatprep.subr.bf16.mxu0 0
    %1847 = vmatpush1.bf16.msra.mxu0 0
    %1848 = vmatprep.subr.bf16.mxu0 0
    %1849 = vmatpush1.bf16.msra.mxu0 0
    %1850 = vmatprep.subr.bf16.mxu0 0
    %1851 = vmatpush1.bf16.msra.mxu0 0
    %1852 = vmatprep.subr.bf16.mxu0 0
    %1853 = vmatpush1.bf16.msra.mxu0 0
    %1854 = vmatprep.subr.bf16.mxu0 0
    %1855 = vmatpush1.bf16.msra.mxu0 0
    %1856 = vmatprep.subr.bf16.mxu0 0
    %1857 = vmatpush1.bf16.msra.mxu0 %v1797
    %1858 = vmatprep.subr.bf16.mxu0 0
    %1859 = vmatpush2.bf16.msra.mxu0 0
    %1860 = vmatprep.subr.bf16.mxu0 0
    %1861 = vmatpush2.bf16.msra.mxu0 0
    %1862 = vmatprep.subr.bf16.mxu0 0
    %1863 = vmatpush2.bf16.msra.mxu0 0
    %1864 = vmatprep.subr.bf16.mxu0 0
    %1865 = vmatpush2.bf16.msra.mxu0 0
    %1866 = vmatprep.subr.bf16.mxu0 0
    %1867 = vmatpush2.bf16.msra.mxu0 0
    %1868 = vmatprep.subr.bf16.mxu0 0
    %1869 = vmatpush2.bf16.msra.mxu0 0
    %1870 = vmatprep.subr.bf16.mxu0 0
    %1871 = vmatpush2.bf16.msra.mxu0 0
    %1872 = vmatprep.subr.bf16.mxu0 0
    %1873 = vmatpush2.bf16.msra.mxu0 0
    %1874 = vmatprep.mubr.bf16.mxu0 0
    %1875 = vmatmul.mubr.bf16.gmra.mxu0 %v1840
    %v1876 = vpop.f32.mrf.mxu0
    %v1877 = vadd.f32 %v1834, %v1876
    %v1878 = vpop.f32.mrf.mxu0
    %v1879 = vpop.f32.mrf.mxu0
    %v1880 = vpop.f32.mrf.mxu0
    %1881 = vdwg.mxu0
    %v1883 = vrot.slane %v1608, 4
    %v1885 = vsel %vm1636, %v1883, 0
    %1887 = vmatprep.subr.bf16.mxu0 0
    %1888 = vmatpush1.bf16.msra.mxu0 0
    %1889 = vmatprep.subr.bf16.mxu0 0
    %1890 = vmatpush1.bf16.msra.mxu0 0
    %1891 = vmatprep.subr.bf16.mxu0 0
    %1892 = vmatpush1.bf16.msra.mxu0 0
    %1893 = vmatprep.subr.bf16.mxu0 0
    %1894 = vmatpush1.bf16.msra.mxu0 0
    %1895 = vmatprep.subr.bf16.mxu0 0
    %1896 = vmatpush1.bf16.msra.mxu0 0
    %1897 = vmatprep.subr.bf16.mxu0 0
    %1898 = vmatpush1.bf16.msra.mxu0 0
    %1899 = vmatprep.subr.bf16.mxu0 0
    %1900 = vmatpush1.bf16.msra.mxu0 0
    %1901 = vmatprep.subr.bf16.mxu0 0
    %1902 = vmatpush1.bf16.msra.mxu0 %v1885
    %1903 = vmatprep.subr.bf16.mxu0 0
    %1904 = vmatpush2.bf16.msra.mxu0 0
    %1905 = vmatprep.subr.bf16.mxu0 0
    %1906 = vmatpush2.bf16.msra.mxu0 0
    %1907 = vmatprep.subr.bf16.mxu0 0
    %1908 = vmatpush2.bf16.msra.mxu0 0
    %1909 = vmatprep.subr.bf16.mxu0 0
    %1910 = vmatpush2.bf16.msra.mxu0 0
    %1911 = vmatprep.subr.bf16.mxu0 0
    %1912 = vmatpush2.bf16.msra.mxu0 0
    %1913 = vmatprep.subr.bf16.mxu0 0
    %1914 = vmatpush2.bf16.msra.mxu0 0
    %1915 = vmatprep.subr.bf16.mxu0 0
    %1916 = vmatpush2.bf16.msra.mxu0 0
    %1917 = vmatprep.subr.bf16.mxu0 0
    %1918 = vmatpush2.bf16.msra.mxu0 0
    %1919 = vmatprep.mubr.bf16.mxu0 0
    %1920 = vmatmul.mubr.bf16.gmra.mxu0 %v1840
    %v1921 = vpop.f32.mrf.mxu0
    %v1922 = vadd.f32 0.0, %v1921
    %v1923 = vpop.f32.mrf.mxu0
    %v1924 = vpop.f32.mrf.mxu0
    %v1925 = vpop.f32.mrf.mxu0
    %1926 = vdwg.mxu0
    %v1927 = vadd.f32 %v1877, %v1922
    %1928 = vst [vmem:[%s9 + $0x8] sm:$0xff] %v1927
    // Predicated region
    $region50: #{head_attention.1} parent=1 // pred_check
      _
    $region51: #{head_attention.1} parent=1 // pred_check_branch
      %1930 = sbr.rel (0) target = $region53
    $region52: #{head_attention.1} parent=1 // pred_region
      _
    $region53: #{head_attention.1} parent=1 // pred_fallthru
      _
    // Predicated region
    $region54: #{head_attention.1} parent=1 // pred_check
      _
    $region55: #{head_attention.1} parent=1 // pred_check_branch
      %1932 = sbr.rel (0) target = $region57
    $region56: #{head_attention.1} parent=1 // pred_region
      _
    $region57: #{head_attention.1} parent=1 // pred_fallthru
      _
    // Predicated region
    $region58: #{head_attention.1} parent=1 // pred_check
      _
    $region59: #{head_attention.1} parent=1 // pred_check_branch
      %1934 = sbr.rel (0) target = $region61
    $region60: #{head_attention.1} parent=1 // pred_region
      _
    $region61: #{head_attention.1} parent=1 // pred_fallthru
      _
    // Predicated region
    $region62: #{head_attention.1} parent=1 // pred_check
      _
    $region63: #{head_attention.1} parent=1 // pred_check_branch
      %1936 = sbr.rel (0) target = $region65
    $region64: #{head_attention.1} parent=1 // pred_region
      _
    $region65: #{head_attention.1} parent=1 // pred_fallthru
      _
    %1937 = vsyncpa [#allocation3], 1
    %1938 = vsyncpa [#allocation5], 1

</llo_original>
